<compile_context>
chip_gen: v6e
topology: v6e:2x2x1
jax: 0.10.0
libtpu: 0.0.40
codegen_flags: <defaults>
</compile_context>

<pallas_src>
import jax
import jax.numpy as jnp
from jax.experimental import pallas as pl
from jax.experimental.pallas import tpu as pltpu


def _triplet_kernel(x_ref, trow_ref, tcol_ref, margin_ref, nreal_ref,
                    o_ref, acc_ref):
    k = pl.program_id(0)
    nsteps = pl.num_programs(0)

    # --- Gram accumulation over the K (feature) axis ---------------------
    @pl.when(k == 0)
    def _():
        acc_ref[...] = jnp.zeros_like(acc_ref)

    xb = x_ref[...]                                   # (n_pad, tk) f32
    # x @ x.T without materializing a transpose: contract dim 1 of both sides.
    acc_ref[...] += jax.lax.dot_general(
        xb, xb,
        dimension_numbers=(((1,), (1,)), ((), ())),
        preferred_element_type=jnp.float32)

    # --- Hard mining + margin-ranking reduction on the last step ---------
    @pl.when(k == nsteps - 1)
    def _():
        n = acc_ref.shape[0]
        gram = acc_ref[...]                                          # (n, n)

        row = jax.lax.broadcasted_iota(jnp.int32, (n, n), 0)
        col = jax.lax.broadcasted_iota(jnp.int32, (n, n), 1)
        eye = row == col

        # Squared norms straight from the Gram diagonal (dist2 diag == 0).
        # NOTE(perf review #7): the second (axis=0) full-matrix reduction is
        # kept instead of an (n,1)->(1,n) vector relayout for lowering
        # robustness; it is a one-shot epilogue cost.
        masked_diag = jnp.where(eye, gram, 0.0)
        diag_col = jnp.sum(masked_diag, axis=1, keepdims=True)       # (n, 1)
        diag_row = jnp.sum(masked_diag, axis=0, keepdims=True)       # (1, n)
        dist2 = diag_col + diag_row - 2.0 * gram                     # (n, n)
        dist2c = jnp.maximum(dist2, 1e-12)     # reference clamp; sqrt deferred

        t_row = trow_ref[...]                                        # (1, n)
        t_col = tcol_ref[...]                                        # (n, 1)
        same = t_col == t_row                                        # (n, n)

        # Hardest positive: argmax(dist * mask).  clamp/sqrt are monotone, so
        # its distance is just the row max of same-class clamped squared dists
        # (padded columns are excluded via sentinel labels -> same == False).
        dp = jnp.where(same, dist2c, 0.0)
        dist_ap = jnp.sqrt(jnp.max(dp, axis=1, keepdims=True))       # (n, 1)

        # Reference `argmin(dist * ~mask)`: same-class columns are zeroed and
        # every other entry is >= 1e-6, so the first-occurrence argmin is the
        # FIRST same-class column.  Gather its (unclamped) squared distance.
        hn_idx = jnp.min(jnp.where(same, col, n),
                         axis=1, keepdims=True)                      # (n, 1)
        d2_an = jnp.sum(jnp.where(col == hn_idx, dist2, 0.0),
                        axis=1, keepdims=True)                       # (n, 1)
        dist_an = jnp.sqrt(jnp.maximum(d2_an, 0.0))

        # MarginRankingLoss(y=1, 'mean'): mean(max(0, dist_ap - dist_an + m)),
        # averaged over the real (unpadded) rows only.
        margin = margin_ref[0]                                       # scalar
        per = jnp.maximum(dist_ap - dist_an + margin, 0.0)           # (n, 1)

        n_real = nreal_ref[0]                                        # scalar i32
        row1 = jax.lax.broadcasted_iota(jnp.int32, (n, 1), 0)
        valid = (row1 < n_real).astype(jnp.float32)                  # (n, 1)
        loss = (jnp.sum(per * valid, axis=0, keepdims=True)
                / n_real.astype(jnp.float32))                        # (1, 1)
        o_ref[...] = loss


def _round_up(v, m):
    return (v + m - 1) // m * m


def triplet_loss(inputs_nchw, targets, margin=0.3):
    """inputs_nchw: (B, C, W, H) float; targets: (B,) int labels."""
    b, c, w, h = inputs_nchw.shape
    # The reference forward does `inputs.view(b, w, h)` after flattening,
    # which implicitly requires C == 1.
    assert c == 1, "reference forward implicitly requires C == 1"

    n, d = b, c * w * h
    x = inputs_nchw.reshape(n, d).astype(jnp.float32)

    # Lane-dense padding: n_pad multiple of 128 (Gram lane dim / MXU N dim /
    # every (n,n) epilogue tensor), d_pad a multiple of the K tile.
    n_pad = _round_up(max(n, 8), 128)
    d128 = _round_up(d, 128)
    tk = min(d128, 1024)
    d_pad = _round_up(d128, tk)
    kt = d_pad // tk

    x_p = jnp.zeros((n_pad, d_pad), jnp.float32).at[:n, :d].set(x)

    t = targets.astype(jnp.int32).reshape(n)
    if n_pad > n:
        # Unique sentinel labels (all > any real label) so padded rows never
        # pair with real rows; they sit at the end so tie-breaks are unchanged.
        pad_lab = jnp.max(t) + 1 + jnp.arange(n_pad - n, dtype=jnp.int32)
        t_full = jnp.concatenate([t, pad_lab])
    else:
        t_full = t
    t_row = t_full.reshape(1, n_pad)
    t_col = t_full.reshape(n_pad, 1)

    margin_arr = jnp.full((1,), margin, dtype=jnp.float32)
    nreal_arr = jnp.full((1,), n, dtype=jnp.int32)

    # Explicit scoped-VMEM budget: f32 Gram scratch + double-buffered x tiles
    # + headroom.  Keeps large batches off the default scoped limit (and makes
    # the footprint explicit for v7x's 64 MiB physical VMEM).
    acc_bytes = 4 * n_pad * n_pad
    x_tile_bytes = 4 * n_pad * tk
    vmem_limit = min(128 * 1024 * 1024,
                     acc_bytes + 2 * x_tile_bytes + (16 << 20))

    out = pl.pallas_call(
        _triplet_kernel,
        out_shape=jax.ShapeDtypeStruct((1, 1), jnp.float32),
        grid=(kt,),
        in_specs=[
            pl.BlockSpec((n_pad, tk), lambda k: (0, k)),       # x (K-tiled)
            pl.BlockSpec((1, n_pad), lambda k: (0, 0)),        # labels (row)
            pl.BlockSpec((n_pad, 1), lambda k: (0, 0)),        # labels (col)
            pl.BlockSpec(memory_space=pltpu.MemorySpace.SMEM),  # margin
            pl.BlockSpec(memory_space=pltpu.MemorySpace.SMEM),  # real batch n
        ],
        out_specs=pl.BlockSpec((1, 1), lambda k: (0, 0)),
        scratch_shapes=[pltpu.VMEM((n_pad, n_pad), jnp.float32)],
        compiler_params=pltpu.CompilerParams(
            dimension_semantics=("arbitrary",),
            vmem_limit_bytes=vmem_limit),
    )(x_p, t_row, t_col, margin_arr, nreal_arr)
    return out[0, 0]


def _reference_loss(inputs_nchw, targets, margin):
    """Pure-JAX transcription of the PyTorch module (DC module = identity)."""
    b, c, w, h = inputs_nchw.shape
    x = inputs_nchw.reshape(b, -1).astype(jnp.float32)
    sq = jnp.sum(x * x, axis=1, keepdims=True)
    dist = sq + sq.T - 2.0 * (x @ x.T)
    dist = jnp.sqrt(jnp.clip(dist, 1e-12))
    mask = targets[:, None] == targets[None, :]
    hp = jnp.argmax(dist * mask, axis=1)
    hn = jnp.argmin(dist * (~mask), axis=1)
    dist_ap = jnp.sqrt(jnp.sum((x - x[hp]) ** 2, axis=1))
    dist_an = jnp.sqrt(jnp.sum((x - x[hn]) ** 2, axis=1))
    return jnp.mean(jnp.maximum(dist_ap - dist_an + margin, 0.0))


if __name__ == "__main__":
    key = jax.random.PRNGKey(0)
    b, c, w, h = 8, 1, 16, 16
    inputs = jax.random.normal(key, (b, c, w, h), dtype=jnp.float32)
    targets = jnp.array([0, 0, 1, 1, 2, 2, 3, 3], dtype=jnp.int32)

    loss = triplet_loss(inputs, targets, margin=0.3)
    loss = jax.block_until_ready(loss)

    ref = jax.block_until_ready(_reference_loss(inputs, targets, 0.3))
    assert abs(float(loss) - float(ref)) <= 1e-3 + 1e-3 * abs(float(ref)), (
        float(loss), float(ref))
    print("KERNEL_OK")
</pallas_src>

<mosaic_0001>
module attributes {stable_mosaic.version = 11 : i64} {
  func.func @_triplet_kernel(%arg0: i32, %arg1: memref<128x256xf32, #tpu.memory_space<vmem>>, %arg2: memref<1x128xi32, #tpu.memory_space<vmem>>, %arg3: memref<128x1xi32, #tpu.memory_space<vmem>>, %arg4: memref<1xf32, #tpu.memory_space<smem>>, %arg5: memref<1xi32, #tpu.memory_space<smem>>, %arg6: memref<1x1xf32, #tpu.memory_space<vmem>>, %arg7: memref<128x128xf32, #tpu.memory_space<vmem>>) attributes {dimension_semantics = [#tpu.dimension_semantics<arbitrary>], iteration_bounds = array<i64: 1>, scalar_prefetch = 0 : i64, scratch_operands = 1 : i64, tpu.core_type = #tpu.core_type<tc>, window_params = [{transform_indices = @transform_0, window_bounds = array<i64: 128, 256>}, {pipeline_mode = #tpu.pipeline_mode<synchronous>, transform_indices = @transform_1, window_bounds = array<i64: 1, 128>}, {pipeline_mode = #tpu.pipeline_mode<synchronous>, transform_indices = @transform_2, window_bounds = array<i64: 128, 1>}, {transform_indices = @transform_3, window_bounds = array<i64: 1>}, {transform_indices = @transform_4, window_bounds = array<i64: 1>}, {pipeline_mode = #tpu.pipeline_mode<synchronous>, transform_indices = @transform_5, window_bounds = array<i64: 1, 1>}]} {
    %c0_i32 = arith.constant 0 : i32
    %0 = arith.cmpi eq, %arg0, %c0_i32 : i32
    %1 = arith.extui %0 : i1 to i32
    %c0_i32_0 = arith.constant 0 : i32
    %2 = arith.cmpi ne, %1, %c0_i32_0 : i32
    scf.if %2 {
      %cst_8 = arith.constant 0.000000e+00 : f32
      %11 = vector.broadcast %cst_8 : f32 to vector<128x128xf32>
      %c0_9 = arith.constant 0 : index
      %c0_10 = arith.constant 0 : index
      %12 = vector.load %arg7[%c0_9, %c0_10] : memref<128x128xf32, #tpu.memory_space<vmem>>, vector<128x128xf32>
      tpu.vector_store %arg7[%c0_9, %c0_10], %11 {strides = array<i32>} : memref<128x128xf32, #tpu.memory_space<vmem>>, vector<128x128xf32>,
    } else {
    }
    %c0 = arith.constant 0 : index
    %c0_1 = arith.constant 0 : index
    %3 = vector.load %arg1[%c0, %c0_1] : memref<128x256xf32, #tpu.memory_space<vmem>>, vector<128x256xf32>
    %c0_2 = arith.constant 0 : index
    %c0_3 = arith.constant 0 : index
    %4 = vector.load %arg7[%c0_2, %c0_3] : memref<128x128xf32, #tpu.memory_space<vmem>>, vector<128x128xf32>
    %cst = arith.constant dense<0.000000e+00> : vector<128x128xf32>
    %5 = tpu.matmul %3, %3, %cst {dimension_numbers = #tpu.dot_dimension_numbers<[1], [1], [0], [0], [0, 0, 1, 0], [], []>} : vector<128x256xf32>, vector<128x256xf32>, vector<128x128xf32> -> vector<128x128xf32>
    %6 = arith.addf %4, %5 : vector<128x128xf32>
    %c0_4 = arith.constant 0 : index
    %c0_5 = arith.constant 0 : index
    %7 = vector.load %arg7[%c0_4, %c0_5] : memref<128x128xf32, #tpu.memory_space<vmem>>, vector<128x128xf32>
    tpu.vector_store %arg7[%c0_4, %c0_5], %6 {strides = array<i32>} : memref<128x128xf32, #tpu.memory_space<vmem>>, vector<128x128xf32>,
    %c0_i32_6 = arith.constant 0 : i32
    %8 = arith.cmpi eq, %arg0, %c0_i32_6 : i32
    %9 = arith.extui %8 : i1 to i32
    %c0_i32_7 = arith.constant 0 : i32
    %10 = arith.cmpi ne, %9, %c0_i32_7 : i32
    scf.if %10 {
      %c0_8 = arith.constant 0 : index
      %c0_9 = arith.constant 0 : index
      %11 = vector.load %arg7[%c0_8, %c0_9] : memref<128x128xf32, #tpu.memory_space<vmem>>, vector<128x128xf32>
      %12 = tpu.iota {dimensions = array<i32: 0>} : vector<128x128xi32>
      %13 = tpu.iota {dimensions = array<i32: 1>} : vector<128x128xi32>
      %14 = arith.cmpi eq, %12, %13 : vector<128x128xi32>
      %cst_10 = arith.constant 0.000000e+00 : f32
      %15 = vector.broadcast %cst_10 : f32 to vector<128x128xf32>
      %16 = arith.select %14, %11, %15 : vector<128x128xi1>, vector<128x128xf32>
      %cst_11 = arith.constant dense<0.000000e+00> : vector<128xf32>
      %17 = vector.multi_reduction <add>, %16, %cst_11 [1] : vector<128x128xf32> to vector<128xf32>
      %18 = vector.shape_cast %17 : vector<128xf32> to vector<128x1xf32>
      %cst_12 = arith.constant dense<0.000000e+00> : vector<128xf32>
      %19 = vector.multi_reduction <add>, %16, %cst_12 [0] : vector<128x128xf32> to vector<128xf32>
      %20 = vector.shape_cast %19 : vector<128xf32> to vector<1x128xf32>
      %21 = vector.broadcast %18 : vector<128x1xf32> to vector<128x128xf32>
      %22 = vector.broadcast %20 : vector<1x128xf32> to vector<128x128xf32>
      %23 = arith.addf %21, %22 : vector<128x128xf32>
      %cst_13 = arith.constant 2.000000e+00 : f32
      %24 = vector.broadcast %cst_13 : f32 to vector<128x128xf32>
      %25 = arith.mulf %24, %11 : vector<128x128xf32>
      %26 = arith.subf %23, %25 : vector<128x128xf32>
      %cst_14 = arith.constant 9.99999996E-13 : f32
      %27 = vector.broadcast %cst_14 : f32 to vector<128x128xf32>
      %28 = arith.maximumf %26, %27 : vector<128x128xf32>
      %c0_15 = arith.constant 0 : index
      %c0_16 = arith.constant 0 : index
      %29 = vector.load %arg2[%c0_15, %c0_16] : memref<1x128xi32, #tpu.memory_space<vmem>>, vector<1x128xi32>
      %c0_17 = arith.constant 0 : index
      %c0_18 = arith.constant 0 : index
      %30 = vector.load %arg3[%c0_17, %c0_18] : memref<128x1xi32, #tpu.memory_space<vmem>>, vector<128x1xi32>
      %31 = vector.broadcast %30 : vector<128x1xi32> to vector<128x128xi32>
      %32 = vector.broadcast %29 : vector<1x128xi32> to vector<128x128xi32>
      %33 = arith.cmpi eq, %31, %32 : vector<128x128xi32>
      %cst_19 = arith.constant 0.000000e+00 : f32
      %34 = vector.broadcast %cst_19 : f32 to vector<128x128xf32>
      %35 = arith.select %33, %28, %34 : vector<128x128xi1>, vector<128x128xf32>
      %cst_20 = arith.constant dense<0xFF800000> : vector<128xf32>
      %36 = vector.multi_reduction <maximumf>, %35, %cst_20 [1] : vector<128x128xf32> to vector<128xf32>
      %37 = vector.shape_cast %36 : vector<128xf32> to vector<128x1xf32>
      %38 = math.sqrt %37 : vector<128x1xf32>
      %c128_i32 = arith.constant 128 : i32
      %39 = vector.broadcast %c128_i32 : i32 to vector<128x128xi32>
      %40 = arith.select %33, %13, %39 : vector<128x128xi1>, vector<128x128xi32>
      %cst_21 = arith.constant dense<2147483647> : vector<128xi32>
      %41 = vector.multi_reduction <minsi>, %40, %cst_21 [1] : vector<128x128xi32> to vector<128xi32>
      %42 = vector.shape_cast %41 : vector<128xi32> to vector<128x1xi32>
      %43 = vector.broadcast %42 : vector<128x1xi32> to vector<128x128xi32>
      %44 = arith.cmpi eq, %13, %43 : vector<128x128xi32>
      %cst_22 = arith.constant 0.000000e+00 : f32
      %45 = vector.broadcast %cst_22 : f32 to vector<128x128xf32>
      %46 = arith.select %44, %26, %45 : vector<128x128xi1>, vector<128x128xf32>
      %cst_23 = arith.constant dense<0.000000e+00> : vector<128xf32>
      %47 = vector.multi_reduction <add>, %46, %cst_23 [1] : vector<128x128xf32> to vector<128xf32>
      %48 = vector.shape_cast %47 : vector<128xf32> to vector<128x1xf32>
      %cst_24 = arith.constant 0.000000e+00 : f32
      %49 = vector.broadcast %cst_24 : f32 to vector<128x1xf32>
      %50 = arith.maximumf %48, %49 : vector<128x1xf32>
      %51 = math.sqrt %50 : vector<128x1xf32>
      %c0_25 = arith.constant 0 : index
      %52 = memref.load %arg4[%c0_25] : memref<1xf32, #tpu.memory_space<smem>>
      %53 = arith.subf %38, %51 : vector<128x1xf32>
      %54 = vector.broadcast %52 : f32 to vector<128x1xf32>
      %55 = arith.addf %53, %54 : vector<128x1xf32>
      %cst_26 = arith.constant 0.000000e+00 : f32
      %56 = vector.broadcast %cst_26 : f32 to vector<128x1xf32>
      %57 = arith.maximumf %55, %56 : vector<128x1xf32>
      %c0_27 = arith.constant 0 : index
      %58 = memref.load %arg5[%c0_27] : memref<1xi32, #tpu.memory_space<smem>>
      %59 = tpu.iota {dimensions = array<i32: 0>} : vector<128x1xi32>
      %60 = vector.broadcast %58 : i32 to vector<128x1xi32>
      %61 = arith.cmpi slt, %59, %60 : vector<128x1xi32>
      %62 = arith.extui %61 : vector<128x1xi1> to vector<128x1xi32>
      %63 = arith.sitofp %62 : vector<128x1xi32> to vector<128x1xf32>
      %64 = arith.mulf %57, %63 : vector<128x1xf32>
      %cst_28 = arith.constant dense<0.000000e+00> : vector<1xf32>
      %65 = vector.multi_reduction <add>, %64, %cst_28 [0] : vector<128x1xf32> to vector<1xf32>
      %66 = vector.shape_cast %65 : vector<1xf32> to vector<1x1xf32>
      %67 = arith.sitofp %58 : i32 to f32
      %68 = vector.broadcast %67 : f32 to vector<1x1xf32>
      %69 = arith.divf %66, %68 : vector<1x1xf32>
      %c0_29 = arith.constant 0 : index
      %c0_30 = arith.constant 0 : index
      %70 = vector.load %arg6[%c0_29, %c0_30] : memref<1x1xf32, #tpu.memory_space<vmem>>, vector<1x1xf32>
      tpu.vector_store %arg6[%c0_29, %c0_30], %69 {strides = array<i32>} : memref<1x1xf32, #tpu.memory_space<vmem>>, vector<1x1xf32>,
    } else {
    }
    return
  }
  func.func @transform_0(%arg0: i32) -> (i32, i32) {
    %c0_i32 = arith.constant 0 : i32
    %c0_i32_0 = arith.constant 0 : i32
    return %c0_i32, %arg0 : i32, i32
  }
  func.func @transform_1(%arg0: i32) -> (i32, i32) {
    %c0_i32 = arith.constant 0 : i32
    %c0_i32_0 = arith.constant 0 : i32
    %c0_i32_1 = arith.constant 0 : i32
    return %c0_i32, %c0_i32_0 : i32, i32
  }
  func.func @transform_2(%arg0: i32) -> (i32, i32) {
    %c0_i32 = arith.constant 0 : i32
    %c0_i32_0 = arith.constant 0 : i32
    %c0_i32_1 = arith.constant 0 : i32
    return %c0_i32, %c0_i32_0 : i32, i32
  }
  func.func @transform_3(%arg0: i32) -> i32 {
    %c0_i32 = arith.constant 0 : i32
    %c0_i32_0 = arith.constant 0 : i32
    return %c0_i32 : i32
  }
  func.func @transform_4(%arg0: i32) -> i32 {
    %c0_i32 = arith.constant 0 : i32
    %c0_i32_0 = arith.constant 0 : i32
    return %c0_i32 : i32
  }
  func.func @transform_5(%arg0: i32) -> (i32, i32) {
    %c0_i32 = arith.constant 0 : i32
    %c0_i32_0 = arith.constant 0 : i32
    %c0_i32_1 = arith.constant 0 : i32
    return %c0_i32, %c0_i32_0 : i32, i32
  }
}

</mosaic_0001>

<llo_original>
// kernel: tpu_custom_call.1
$region0: #{tpu_custom_call.1}
  #allocation0 [shape = 'u32[]', space=smem, size = 0x4, offset = 0x4, fixed_abs, tag = 'smem constant byte address 0x4 - core index']
  #allocation1 [shape = 'u32[144,128]{1,0:T(1,128)}', space=vmem, size = 0x12000, scoped, tag = 'internal scratch']
  #allocation2 [shape = 'f32[128,128]{1,0:T(8,128)}', space=vmem, size = 0x10000, scoped, tag = 'scratch operand']
  #allocation3 [shape = 'f32[1]{0:T(128)S(6)}', space=smem, size = 0x200, scoped, tag = 'scoped memory for tpu_custom_call.1']
  #allocation4 [shape = 's32[1]{0:T(128)S(6)}', space=smem, size = 0x200, scoped, tag = 'scoped memory for tpu_custom_call.1']
  %s0 = inlined_call_operand.hbm [shape: f32[128,256], index: 0, kind: input, shape index: {}]
  %s1 = inlined_call_operand.vmem [shape: s32[1,128], index: 1, kind: input, shape index: {}]
  %s2 = inlined_call_operand.vmem [shape: s32[128,1], index: 2, kind: input, shape index: {}]
  %s3 = inlined_call_operand.<no memory space> [shape: f32[1], index: 3, kind: input, shape index: {}]
  %s4 = inlined_call_operand.<no memory space> [shape: s32[1], index: 4, kind: input, shape index: {}]
  %s5 = inlined_call_operand.hbm [shape: f32[1,1], index: 5, kind: output, shape index: {}]
  %s6 = sld [smem:[#allocation0]]
  $region42: #{tpu_custom_call.1} parent=0
    _
  %s8 = ssub.s32 1, %s6
  %s9 = scalar_select 0, %s8, %s6
  %10 = sst [smem:[#allocation3]] %s3
  %11 = sst [smem:[#allocation4]] %s4
  $region1: #{tpu_custom_call.1} parent=0
    #allocation5 [shape = 'u8[131072]{0}', space=vmem, size = 0x20000, scoped, tag = 'input window, operand 0, single buffered']
    #allocation6 [shape = 's32[1]{0}', space=sflag, size = 0x4, scoped, tag = 'scoped memory for tpu_custom_call.1']
    #allocation7 [shape = 's32[1]{0}', space=sflag, size = 0x4, scoped, tag = 'scoped memory for tpu_custom_call.1']
    #allocation8 [shape = 'u8[512]{0}', space=vmem, size = 0x400, scoped, tag = 'output window, operand 0, single buffered']
    %12 = vsyncpa [#allocation6], 0
    %13 = vsyncpa [#allocation7], 0
    // Predicated region
    $region2: #{tpu_custom_call.1} parent=1 // pred_check
      _
    $region3: #{tpu_custom_call.1} parent=1 // pred_check_branch
      %15 = sbr.rel (0) target = $region5
    $region4: #{tpu_custom_call.1} parent=1 // pred_region
      %s17 = ssub.s32 4096, 4096
      %18 = vsyncadd [#allocation6], %s17
      %s19 = sshll.u32 [#allocation5], 4
      %s20 = int_to_ptr.vmem [resolvable:$true] %s19
      %25 = dma.hbm_to_vmem [thread:$0]  %s0, 4096, %s20, [#allocation6], 256, 256, 16
    $region5: #{tpu_custom_call.1} parent=1 // pred_fallthru
      _
    // Predicated region
    $region6: #{tpu_custom_call.1} parent=1 // pred_check
      _
    $region7: #{tpu_custom_call.1} parent=1 // pred_check_branch
      %27 = sbr.rel (0) target = $region9
    $region8: #{tpu_custom_call.1} parent=1 // pred_region
      _
    $region9: #{tpu_custom_call.1} parent=1 // pred_fallthru
      _
    // Predicated region
    $region10: #{tpu_custom_call.1} parent=1 // pred_check
      _
    $region11: #{tpu_custom_call.1} parent=1 // pred_check_branch
      %29 = sbr.rel (0) target = $region13
    $region12: #{tpu_custom_call.1} parent=1 // pred_region
      _
    $region13: #{tpu_custom_call.1} parent=1 // pred_fallthru
      _
    // Predicated region
    $region14: #{tpu_custom_call.1} parent=1 // pred_check
      _
    $region15: #{tpu_custom_call.1} parent=1 // pred_check_branch
      %31 = sbr.rel (0) target = $region17
    $region16: #{tpu_custom_call.1} parent=1 // pred_region
      _
    $region17: #{tpu_custom_call.1} parent=1 // pred_fallthru
      _
    // Predicated region
    $region18: #{tpu_custom_call.1} parent=1 // pred_check
      _
    $region19: #{tpu_custom_call.1} parent=1 // pred_check_branch
      %33 = sbr.rel (0) target = $region21
    $region20: #{tpu_custom_call.1} parent=1 // pred_region
      _
    $region21: #{tpu_custom_call.1} parent=1 // pred_fallthru
      _
    // Predicated region
    $region22: #{tpu_custom_call.1} parent=1 // pred_check
      _
    $region23: #{tpu_custom_call.1} parent=1 // pred_check_branch
      %35 = sbr.rel (0) target = $region25
    $region24: #{tpu_custom_call.1} parent=1 // pred_region
      %36 = dma.done [#allocation6], 4096
    $region25: #{tpu_custom_call.1} parent=1 // pred_fallthru
      _
    %p37 = scmp.eq.s32.totalorder 0, 0
    // Predicated region
    $region26: #{tpu_custom_call.1} parent=1 // pred_check
      %p38 = pneg %p37
    $region27: #{tpu_custom_call.1} parent=1 // pred_check_branch
      %40 = sbr.rel (%p38) target = $region29
    $region28: #{tpu_custom_call.1} parent=1 // pred_region
      %41 = vst [vmem:[#allocation2] sm:$0xff] 0.0
      %42 = vst [vmem:[#allocation2 + $0x8] sm:$0xff] 0.0
      %43 = vst [vmem:[#allocation2 + $0x10] sm:$0xff] 0.0
      %44 = vst [vmem:[#allocation2 + $0x18] sm:$0xff] 0.0
      %45 = vst [vmem:[#allocation2 + $0x20] sm:$0xff] 0.0
      %46 = vst [vmem:[#allocation2 + $0x28] sm:$0xff] 0.0
      %47 = vst [vmem:[#allocation2 + $0x30] sm:$0xff] 0.0
      %48 = vst [vmem:[#allocation2 + $0x38] sm:$0xff] 0.0
      %49 = vst [vmem:[#allocation2 + $0x40] sm:$0xff] 0.0
      %50 = vst [vmem:[#allocation2 + $0x48] sm:$0xff] 0.0
      %51 = vst [vmem:[#allocation2 + $0x50] sm:$0xff] 0.0
      %52 = vst [vmem:[#allocation2 + $0x58] sm:$0xff] 0.0
      %53 = vst [vmem:[#allocation2 + $0x60] sm:$0xff] 0.0
      %54 = vst [vmem:[#allocation2 + $0x68] sm:$0xff] 0.0
      %55 = vst [vmem:[#allocation2 + $0x70] sm:$0xff] 0.0
      %56 = vst [vmem:[#allocation2 + $0x78] sm:$0xff] 0.0
    $region29: #{tpu_custom_call.1} parent=1 // pred_fallthru
      _
    %v57 = vld [vmem:[#allocation5] sm:$0xff]
    %v58 = vld [vmem:[#allocation5 + $0x8] sm:$0xff]
    %v59 = vld [vmem:[#allocation5 + $0x10] sm:$0xff]
    %v60 = vld [vmem:[#allocation5 + $0x18] sm:$0xff]
    %v61 = vld [vmem:[#allocation5 + $0x20] sm:$0xff]
    %v62 = vld [vmem:[#allocation5 + $0x28] sm:$0xff]
    %v63 = vld [vmem:[#allocation5 + $0x30] sm:$0xff]
    %v64 = vld [vmem:[#allocation5 + $0x38] sm:$0xff]
    %v65 = vld [vmem:[#allocation5 + $0x40] sm:$0xff]
    %v66 = vld [vmem:[#allocation5 + $0x48] sm:$0xff]
    %v67 = vld [vmem:[#allocation5 + $0x50] sm:$0xff]
    %v68 = vld [vmem:[#allocation5 + $0x58] sm:$0xff]
    %v69 = vld [vmem:[#allocation5 + $0x60] sm:$0xff]
    %v70 = vld [vmem:[#allocation5 + $0x68] sm:$0xff]
    %v71 = vld [vmem:[#allocation5 + $0x70] sm:$0xff]
    %v72 = vld [vmem:[#allocation5 + $0x78] sm:$0xff]
    %v73 = vld [vmem:[#allocation5 + $0x80] sm:$0xff]
    %v74 = vld [vmem:[#allocation5 + $0x88] sm:$0xff]
    %v75 = vld [vmem:[#allocation5 + $0x90] sm:$0xff]
    %v76 = vld [vmem:[#allocation5 + $0x98] sm:$0xff]
    %v77 = vld [vmem:[#allocation5 + $0xa0] sm:$0xff]
    %v78 = vld [vmem:[#allocation5 + $0xa8] sm:$0xff]
    %v79 = vld [vmem:[#allocation5 + $0xb0] sm:$0xff]
    %v80 = vld [vmem:[#allocation5 + $0xb8] sm:$0xff]
    %v81 = vld [vmem:[#allocation5 + $0xc0] sm:$0xff]
    %v82 = vld [vmem:[#allocation5 + $0xc8] sm:$0xff]
    %v83 = vld [vmem:[#allocation5 + $0xd0] sm:$0xff]
    %v84 = vld [vmem:[#allocation5 + $0xd8] sm:$0xff]
    %v85 = vld [vmem:[#allocation5 + $0xe0] sm:$0xff]
    %v86 = vld [vmem:[#allocation5 + $0xe8] sm:$0xff]
    %v87 = vld [vmem:[#allocation5 + $0xf0] sm:$0xff]
    %v88 = vld [vmem:[#allocation5 + $0xf8] sm:$0xff]
    %v89 = vld [vmem:[#allocation2] sm:$0xff]
    %v90 = vld [vmem:[#allocation2 + $0x8] sm:$0xff]
    %v91 = vld [vmem:[#allocation2 + $0x10] sm:$0xff]
    %v92 = vld [vmem:[#allocation2 + $0x18] sm:$0xff]
    %v93 = vld [vmem:[#allocation2 + $0x20] sm:$0xff]
    %v94 = vld [vmem:[#allocation2 + $0x28] sm:$0xff]
    %v95 = vld [vmem:[#allocation2 + $0x30] sm:$0xff]
    %v96 = vld [vmem:[#allocation2 + $0x38] sm:$0xff]
    %v97 = vld [vmem:[#allocation2 + $0x40] sm:$0xff]
    %v98 = vld [vmem:[#allocation2 + $0x48] sm:$0xff]
    %v99 = vld [vmem:[#allocation2 + $0x50] sm:$0xff]
    %v100 = vld [vmem:[#allocation2 + $0x58] sm:$0xff]
    %v101 = vld [vmem:[#allocation2 + $0x60] sm:$0xff]
    %v102 = vld [vmem:[#allocation2 + $0x68] sm:$0xff]
    %v103 = vld [vmem:[#allocation2 + $0x70] sm:$0xff]
    %v104 = vld [vmem:[#allocation2 + $0x78] sm:$0xff]
    %105 = vmatprep.subr.mxu0 %v88
    %106 = vmatpush1.xpose.msra.mxu0 %v87
    %107 = vmatprep.subr.mxu0 %v86
    %108 = vmatpush1.xpose.msra.mxu0 %v85
    %109 = vmatprep.subr.mxu0 %v84
    %110 = vmatpush1.xpose.msra.mxu0 %v83
    %111 = vmatprep.subr.mxu0 %v82
    %112 = vmatpush1.xpose.msra.mxu0 %v81
    %113 = vmatprep.subr.mxu0 %v80
    %114 = vmatpush1.xpose.msra.mxu0 %v79
    %115 = vmatprep.subr.mxu0 %v78
    %116 = vmatpush1.xpose.msra.mxu0 %v77
    %117 = vmatprep.subr.mxu0 %v76
    %118 = vmatpush1.xpose.msra.mxu0 %v75
    %119 = vmatprep.subr.mxu0 %v74
    %120 = vmatpush1.xpose.msra.mxu0 %v73
    %121 = vmatprep.subr.mxu0 %v72
    %122 = vmatpush1.xpose.msra.mxu0 %v71
    %123 = vmatprep.subr.mxu0 %v70
    %124 = vmatpush1.xpose.msra.mxu0 %v69
    %125 = vmatprep.subr.mxu0 %v68
    %126 = vmatpush1.xpose.msra.mxu0 %v67
    %127 = vmatprep.subr.mxu0 %v66
    %128 = vmatpush1.xpose.msra.mxu0 %v65
    %129 = vmatprep.subr.mxu0 %v64
    %130 = vmatpush1.xpose.msra.mxu0 %v63
    %131 = vmatprep.subr.mxu0 %v62
    %132 = vmatpush1.xpose.msra.mxu0 %v61
    %133 = vmatprep.subr.mxu0 %v60
    %134 = vmatpush1.xpose.msra.mxu0 %v59
    %135 = vmatprep.subr.mxu0 %v58
    %136 = vmatpush1.xpose.msra.mxu0 %v57
    %137 = vmatprep.subr.mxu0 0.0
    %138 = vmatpush2.xpose.msra.mxu0 0.0
    %139 = vmatprep.subr.mxu0 0.0
    %140 = vmatpush2.xpose.msra.mxu0 0.0
    %141 = vmatprep.subr.mxu0 0.0
    %142 = vmatpush2.xpose.msra.mxu0 0.0
    %143 = vmatprep.subr.mxu0 0.0
    %144 = vmatpush2.xpose.msra.mxu0 0.0
    %145 = vmatprep.subr.mxu0 0.0
    %146 = vmatpush2.xpose.msra.mxu0 0.0
    %147 = vmatprep.subr.mxu0 0.0
    %148 = vmatpush2.xpose.msra.mxu0 0.0
    %149 = vmatprep.subr.mxu0 0.0
    %150 = vmatpush2.xpose.msra.mxu0 0.0
    %151 = vmatprep.subr.mxu0 0.0
    %152 = vmatpush2.xpose.msra.mxu0 0.0
    %153 = vmatprep.subr.mxu0 0.0
    %154 = vmatpush2.xpose.msra.mxu0 0.0
    %155 = vmatprep.subr.mxu0 0.0
    %156 = vmatpush2.xpose.msra.mxu0 0.0
    %157 = vmatprep.subr.mxu0 0.0
    %158 = vmatpush2.xpose.msra.mxu0 0.0
    %159 = vmatprep.subr.mxu0 0.0
    %160 = vmatpush2.xpose.msra.mxu0 0.0
    %161 = vmatprep.subr.mxu0 0.0
    %162 = vmatpush2.xpose.msra.mxu0 0.0
    %163 = vmatprep.subr.mxu0 0.0
    %164 = vmatpush2.xpose.msra.mxu0 0.0
    %165 = vmatprep.subr.mxu0 0.0
    %166 = vmatpush2.xpose.msra.mxu0 0.0
    %167 = vmatprep.subr.mxu0 0.0
    %168 = vmatpush2.xpose.msra.mxu0 0.0
    %169 = vmatprep.mubr.f32.mxu0 %v58
    %170 = vmatmul.mubr.f32.gmra.mxu0 %v57
    %v171 = vpop.f32.mrf.mxu0
    %v172 = vadd.f32 0.0, %v171
    %v173 = vpop.f32.mrf.mxu0
    %174 = vmatprep.mubr.f32.mxu0 %v60
    %175 = vmatmul.mubr.f32.gmra.mxu0 %v59
    %v176 = vpop.f32.mrf.mxu0
    %v177 = vadd.f32 0.0, %v176
    %v178 = vpop.f32.mrf.mxu0
    %179 = vmatprep.mubr.f32.mxu0 %v62
    %180 = vmatmul.mubr.f32.gmra.mxu0 %v61
    %v181 = vpop.f32.mrf.mxu0
    %v182 = vadd.f32 0.0, %v181
    %v183 = vpop.f32.mrf.mxu0
    %184 = vmatprep.mubr.f32.mxu0 %v64
    %185 = vmatmul.mubr.f32.gmra.mxu0 %v63
    %v186 = vpop.f32.mrf.mxu0
    %v187 = vadd.f32 0.0, %v186
    %v188 = vpop.f32.mrf.mxu0
    %189 = vmatprep.mubr.f32.mxu0 %v66
    %190 = vmatmul.mubr.f32.gmra.mxu0 %v65
    %v191 = vpop.f32.mrf.mxu0
    %v192 = vadd.f32 0.0, %v191
    %v193 = vpop.f32.mrf.mxu0
    %194 = vmatprep.mubr.f32.mxu0 %v68
    %195 = vmatmul.mubr.f32.gmra.mxu0 %v67
    %v196 = vpop.f32.mrf.mxu0
    %v197 = vadd.f32 0.0, %v196
    %v198 = vpop.f32.mrf.mxu0
    %199 = vmatprep.mubr.f32.mxu0 %v70
    %200 = vmatmul.mubr.f32.gmra.mxu0 %v69
    %v201 = vpop.f32.mrf.mxu0
    %v202 = vadd.f32 0.0, %v201
    %v203 = vpop.f32.mrf.mxu0
    %204 = vmatprep.mubr.f32.mxu0 %v72
    %205 = vmatmul.mubr.f32.gmra.mxu0 %v71
    %v206 = vpop.f32.mrf.mxu0
    %v207 = vadd.f32 0.0, %v206
    %v208 = vpop.f32.mrf.mxu0
    %209 = vmatprep.mubr.f32.mxu0 %v74
    %210 = vmatmul.mubr.f32.gmra.mxu0 %v73
    %v211 = vpop.f32.mrf.mxu0
    %v212 = vadd.f32 0.0, %v211
    %v213 = vpop.f32.mrf.mxu0
    %214 = vmatprep.mubr.f32.mxu0 %v76
    %215 = vmatmul.mubr.f32.gmra.mxu0 %v75
    %v216 = vpop.f32.mrf.mxu0
    %v217 = vadd.f32 0.0, %v216
    %v218 = vpop.f32.mrf.mxu0
    %219 = vmatprep.mubr.f32.mxu0 %v78
    %220 = vmatmul.mubr.f32.gmra.mxu0 %v77
    %v221 = vpop.f32.mrf.mxu0
    %v222 = vadd.f32 0.0, %v221
    %v223 = vpop.f32.mrf.mxu0
    %224 = vmatprep.mubr.f32.mxu0 %v80
    %225 = vmatmul.mubr.f32.gmra.mxu0 %v79
    %v226 = vpop.f32.mrf.mxu0
    %v227 = vadd.f32 0.0, %v226
    %v228 = vpop.f32.mrf.mxu0
    %229 = vmatprep.mubr.f32.mxu0 %v82
    %230 = vmatmul.mubr.f32.gmra.mxu0 %v81
    %v231 = vpop.f32.mrf.mxu0
    %v232 = vadd.f32 0.0, %v231
    %v233 = vpop.f32.mrf.mxu0
    %234 = vmatprep.mubr.f32.mxu0 %v84
    %235 = vmatmul.mubr.f32.gmra.mxu0 %v83
    %v236 = vpop.f32.mrf.mxu0
    %v237 = vadd.f32 0.0, %v236
    %v238 = vpop.f32.mrf.mxu0
    %239 = vmatprep.mubr.f32.mxu0 %v86
    %240 = vmatmul.mubr.f32.gmra.mxu0 %v85
    %v241 = vpop.f32.mrf.mxu0
    %v242 = vadd.f32 0.0, %v241
    %v243 = vpop.f32.mrf.mxu0
    %244 = vmatprep.mubr.f32.mxu0 %v88
    %245 = vmatmul.mubr.f32.gmra.mxu0 %v87
    %v246 = vpop.f32.mrf.mxu0
    %v247 = vadd.f32 0.0, %v246
    %v248 = vpop.f32.mrf.mxu0
    %249 = vdwg.mxu0
    %v250 = vadd.f32 %v89, %v172
    %v251 = vadd.f32 %v90, %v177
    %v252 = vadd.f32 %v91, %v182
    %v253 = vadd.f32 %v92, %v187
    %v254 = vadd.f32 %v93, %v192
    %v255 = vadd.f32 %v94, %v197
    %v256 = vadd.f32 %v95, %v202
    %v257 = vadd.f32 %v96, %v207
    %v258 = vadd.f32 %v97, %v212
    %v259 = vadd.f32 %v98, %v217
    %v260 = vadd.f32 %v99, %v222
    %v261 = vadd.f32 %v100, %v227
    %v262 = vadd.f32 %v101, %v232
    %v263 = vadd.f32 %v102, %v237
    %v264 = vadd.f32 %v103, %v242
    %v265 = vadd.f32 %v104, %v247
    %266 = vst [vmem:[#allocation2] sm:$0xff] %v250
    %267 = vst [vmem:[#allocation2 + $0x8] sm:$0xff] %v251
    %268 = vst [vmem:[#allocation2 + $0x10] sm:$0xff] %v252
    %269 = vst [vmem:[#allocation2 + $0x18] sm:$0xff] %v253
    %270 = vst [vmem:[#allocation2 + $0x20] sm:$0xff] %v254
    %271 = vst [vmem:[#allocation2 + $0x28] sm:$0xff] %v255
    %272 = vst [vmem:[#allocation2 + $0x30] sm:$0xff] %v256
    %273 = vst [vmem:[#allocation2 + $0x38] sm:$0xff] %v257
    %274 = vst [vmem:[#allocation2 + $0x40] sm:$0xff] %v258
    %275 = vst [vmem:[#allocation2 + $0x48] sm:$0xff] %v259
    %276 = vst [vmem:[#allocation2 + $0x50] sm:$0xff] %v260
    %277 = vst [vmem:[#allocation2 + $0x58] sm:$0xff] %v261
    %278 = vst [vmem:[#allocation2 + $0x60] sm:$0xff] %v262
    %279 = vst [vmem:[#allocation2 + $0x68] sm:$0xff] %v263
    %280 = vst [vmem:[#allocation2 + $0x70] sm:$0xff] %v264
    %281 = vst [vmem:[#allocation2 + $0x78] sm:$0xff] %v265
    // Predicated region
    $region30: #{tpu_custom_call.1} parent=1 // pred_check
      %p282 = pneg %p37
    $region31: #{tpu_custom_call.1} parent=1 // pred_check_branch
      %284 = sbr.rel (%p282) target = $region33
    $region32: #{tpu_custom_call.1} parent=1 // pred_region
      %v285 = vld [vmem:[#allocation2] sm:$0xff]
      %v286 = vld [vmem:[#allocation2 + $0x8] sm:$0xff]
      %v287 = vld [vmem:[#allocation2 + $0x10] sm:$0xff]
      %v288 = vld [vmem:[#allocation2 + $0x18] sm:$0xff]
      %v289 = vld [vmem:[#allocation2 + $0x20] sm:$0xff]
      %v290 = vld [vmem:[#allocation2 + $0x28] sm:$0xff]
      %v291 = vld [vmem:[#allocation2 + $0x30] sm:$0xff]
      %v292 = vld [vmem:[#allocation2 + $0x38] sm:$0xff]
      %v293 = vld [vmem:[#allocation2 + $0x40] sm:$0xff]
      %v294 = vld [vmem:[#allocation2 + $0x48] sm:$0xff]
      %v295 = vld [vmem:[#allocation2 + $0x50] sm:$0xff]
      %v296 = vld [vmem:[#allocation2 + $0x58] sm:$0xff]
      %v297 = vld [vmem:[#allocation2 + $0x60] sm:$0xff]
      %v298 = vld [vmem:[#allocation2 + $0x68] sm:$0xff]
      %v299 = vld [vmem:[#allocation2 + $0x70] sm:$0xff]
      %v300 = vld [vmem:[#allocation2 + $0x78] sm:$0xff]
      %v301 = vlaneseq
      %v302 = vshrl.u32 %v301, 7
      %v303 = vadd.s32 %v302, 8
      %v304 = vadd.s32 %v302, 16
      %v305 = vadd.s32 %v302, 24
      %v306 = vadd.s32 %v302, 32
      %v307 = vadd.s32 %v302, 40
      %v308 = vadd.s32 %v302, 48
      %v309 = vadd.s32 %v302, 56
      %v310 = vadd.s32 %v302, 64
      %v311 = vadd.s32 %v302, 72
      %v312 = vadd.s32 %v302, 80
      %v313 = vadd.s32 %v302, 88
      %v314 = vadd.s32 %v302, 96
      %v315 = vadd.s32 %v302, 104
      %v316 = vadd.s32 %v302, 112
      %v317 = vadd.s32 %v302, 120
      %v318 = vlaneseq
      %v319 = vand.u32 %v318, 127
      %vm320 = vcmp.eq.s32.totalorder %v302, %v319
      %vm321 = vcmp.eq.s32.totalorder %v303, %v319
      %vm322 = vcmp.eq.s32.totalorder %v304, %v319
      %vm323 = vcmp.eq.s32.totalorder %v305, %v319
      %vm324 = vcmp.eq.s32.totalorder %v306, %v319
      %vm325 = vcmp.eq.s32.totalorder %v307, %v319
      %vm326 = vcmp.eq.s32.totalorder %v308, %v319
      %vm327 = vcmp.eq.s32.totalorder %v309, %v319
      %vm328 = vcmp.eq.s32.totalorder %v310, %v319
      %vm329 = vcmp.eq.s32.totalorder %v311, %v319
      %vm330 = vcmp.eq.s32.totalorder %v312, %v319
      %vm331 = vcmp.eq.s32.totalorder %v313, %v319
      %vm332 = vcmp.eq.s32.totalorder %v314, %v319
      %vm333 = vcmp.eq.s32.totalorder %v315, %v319
      %vm334 = vcmp.eq.s32.totalorder %v316, %v319
      %vm335 = vcmp.eq.s32.totalorder %v317, %v319
      %v336 = vsel %vm320, %v285, 0.0
      %v337 = vsel %vm321, %v286, 0.0
      %v338 = vsel %vm322, %v287, 0.0
      %v339 = vsel %vm323, %v288, 0.0
      %v340 = vsel %vm324, %v289, 0.0
      %v341 = vsel %vm325, %v290, 0.0
      %v342 = vsel %vm326, %v291, 0.0
      %v343 = vsel %vm327, %v292, 0.0
      %v344 = vsel %vm328, %v293, 0.0
      %v345 = vsel %vm329, %v294, 0.0
      %v346 = vsel %vm330, %v295, 0.0
      %v347 = vsel %vm331, %v296, 0.0
      %v348 = vsel %vm332, %v297, 0.0
      %v349 = vsel %vm333, %v298, 0.0
      %v350 = vsel %vm334, %v299, 0.0
      %v351 = vsel %vm335, %v300, 0.0
      %352 = vadd.xlane.f32.xlu0 %v336
      %v353 = vpop.xlane.xlu0 %352
      %354 = vadd.xlane.f32.xlu0 %v337
      %v355 = vpop.xlane.xlu0 %354
      %356 = vadd.xlane.f32.xlu0 %v338
      %v357 = vpop.xlane.xlu0 %356
      %358 = vadd.xlane.f32.xlu0 %v339
      %v359 = vpop.xlane.xlu0 %358
      %360 = vadd.xlane.f32.xlu0 %v340
      %v361 = vpop.xlane.xlu0 %360
      %362 = vadd.xlane.f32.xlu0 %v341
      %v363 = vpop.xlane.xlu0 %362
      %364 = vadd.xlane.f32.xlu0 %v342
      %v365 = vpop.xlane.xlu0 %364
      %366 = vadd.xlane.f32.xlu0 %v343
      %v367 = vpop.xlane.xlu0 %366
      %368 = vadd.xlane.f32.xlu0 %v344
      %v369 = vpop.xlane.xlu0 %368
      %370 = vadd.xlane.f32.xlu0 %v345
      %v371 = vpop.xlane.xlu0 %370
      %372 = vadd.xlane.f32.xlu0 %v346
      %v373 = vpop.xlane.xlu0 %372
      %374 = vadd.xlane.f32.xlu0 %v347
      %v375 = vpop.xlane.xlu0 %374
      %376 = vadd.xlane.f32.xlu0 %v348
      %v377 = vpop.xlane.xlu0 %376
      %378 = vadd.xlane.f32.xlu0 %v349
      %v379 = vpop.xlane.xlu0 %378
      %380 = vadd.xlane.f32.xlu0 %v350
      %v381 = vpop.xlane.xlu0 %380
      %382 = vadd.xlane.f32.xlu0 %v351
      %v383 = vpop.xlane.xlu0 %382
      %v384 = vadd.f32 %v336, %v337
      %v385 = vadd.f32 %v384, %v338
      %v386 = vadd.f32 %v385, %v339
      %v387 = vadd.f32 %v386, %v340
      %v388 = vadd.f32 %v387, %v341
      %v389 = vadd.f32 %v388, %v342
      %v390 = vadd.f32 %v389, %v343
      %v391 = vadd.f32 %v390, %v344
      %v392 = vadd.f32 %v391, %v345
      %v393 = vadd.f32 %v392, %v346
      %v394 = vadd.f32 %v393, %v347
      %v395 = vadd.f32 %v394, %v348
      %v396 = vadd.f32 %v395, %v349
      %v397 = vadd.f32 %v396, %v350
      %v398 = vadd.f32 %v397, %v351
      %v399 = vrot.slane %v398, 4
      %v400 = vadd.f32 %v398, %v399
      %v401 = vrot.slane %v400, 2
      %v402 = vadd.f32 %v400, %v401
      %v403 = vrot.slane %v402, 1
      %v404 = vadd.f32 %v402, %v403
      %v405 = vadd.f32 %v353, %v404
      %v406 = vadd.f32 %v355, %v404
      %v407 = vadd.f32 %v357, %v404
      %v408 = vadd.f32 %v359, %v404
      %v409 = vadd.f32 %v361, %v404
      %v410 = vadd.f32 %v363, %v404
      %v411 = vadd.f32 %v365, %v404
      %v412 = vadd.f32 %v367, %v404
      %v413 = vadd.f32 %v369, %v404
      %v414 = vadd.f32 %v371, %v404
      %v415 = vadd.f32 %v373, %v404
      %v416 = vadd.f32 %v375, %v404
      %v417 = vadd.f32 %v377, %v404
      %v418 = vadd.f32 %v379, %v404
      %v419 = vadd.f32 %v381, %v404
      %v420 = vadd.f32 %v383, %v404
      %v421 = vmul.f32 %v285, 2.0
      %v422 = vmul.f32 %v286, 2.0
      %v423 = vmul.f32 %v287, 2.0
      %v424 = vmul.f32 %v288, 2.0
      %v425 = vmul.f32 %v289, 2.0
      %v426 = vmul.f32 %v290, 2.0
      %v427 = vmul.f32 %v291, 2.0
      %v428 = vmul.f32 %v292, 2.0
      %v429 = vmul.f32 %v293, 2.0
      %v430 = vmul.f32 %v294, 2.0
      %v431 = vmul.f32 %v295, 2.0
      %v432 = vmul.f32 %v296, 2.0
      %v433 = vmul.f32 %v297, 2.0
      %v434 = vmul.f32 %v298, 2.0
      %v435 = vmul.f32 %v299, 2.0
      %v436 = vmul.f32 %v300, 2.0
      %v437 = vsub.f32 %v405, %v421
      %v438 = vsub.f32 %v406, %v422
      %v439 = vsub.f32 %v407, %v423
      %v440 = vsub.f32 %v408, %v424
      %v441 = vsub.f32 %v409, %v425
      %v442 = vsub.f32 %v410, %v426
      %v443 = vsub.f32 %v411, %v427
      %v444 = vsub.f32 %v412, %v428
      %v445 = vsub.f32 %v413, %v429
      %v446 = vsub.f32 %v414, %v430
      %v447 = vsub.f32 %v415, %v431
      %v448 = vsub.f32 %v416, %v432
      %v449 = vsub.f32 %v417, %v433
      %v450 = vsub.f32 %v418, %v434
      %v451 = vsub.f32 %v419, %v435
      %v452 = vsub.f32 %v420, %v436
      %v453 = vmax.f32 %v437, 1e-12
      %v454 = vmax.f32 %v438, 1e-12
      %v455 = vmax.f32 %v439, 1e-12
      %v456 = vmax.f32 %v440, 1e-12
      %v457 = vmax.f32 %v441, 1e-12
      %v458 = vmax.f32 %v442, 1e-12
      %v459 = vmax.f32 %v443, 1e-12
      %v460 = vmax.f32 %v444, 1e-12
      %v461 = vmax.f32 %v445, 1e-12
      %v462 = vmax.f32 %v446, 1e-12
      %v463 = vmax.f32 %v447, 1e-12
      %v464 = vmax.f32 %v448, 1e-12
      %v465 = vmax.f32 %v449, 1e-12
      %v466 = vmax.f32 %v450, 1e-12
      %v467 = vmax.f32 %v451, 1e-12
      %v468 = vmax.f32 %v452, 1e-12
      %v469 = vld [vmem:[%s1] sm:$0x1]
      %v470 = vld [vmem:[%s2] sm:$0xff]
      %v471 = vld [vmem:[%s2 + $0x8] sm:$0xff]
      %v472 = vld [vmem:[%s2 + $0x10] sm:$0xff]
      %v473 = vld [vmem:[%s2 + $0x18] sm:$0xff]
      %v474 = vld [vmem:[%s2 + $0x20] sm:$0xff]
      %v475 = vld [vmem:[%s2 + $0x28] sm:$0xff]
      %v476 = vld [vmem:[%s2 + $0x30] sm:$0xff]
      %v477 = vld [vmem:[%s2 + $0x38] sm:$0xff]
      %v478 = vld [vmem:[%s2 + $0x40] sm:$0xff]
      %v479 = vld [vmem:[%s2 + $0x48] sm:$0xff]
      %v480 = vld [vmem:[%s2 + $0x50] sm:$0xff]
      %v481 = vld [vmem:[%s2 + $0x58] sm:$0xff]
      %v482 = vld [vmem:[%s2 + $0x60] sm:$0xff]
      %v483 = vld [vmem:[%s2 + $0x68] sm:$0xff]
      %v484 = vld [vmem:[%s2 + $0x70] sm:$0xff]
      %v485 = vld [vmem:[%s2 + $0x78] sm:$0xff]
      %486 = vset.pattern.permute.xlu0 0
      %487 = vperm.xlu0 %486, %v470
      %v488 = vpop.permute.xlu0 %487
      %489 = vset.pattern.permute.xlu0 0
      %490 = vperm.xlu0 %489, %v471
      %v491 = vpop.permute.xlu0 %490
      %492 = vset.pattern.permute.xlu0 0
      %493 = vperm.xlu0 %492, %v472
      %v494 = vpop.permute.xlu0 %493
      %495 = vset.pattern.permute.xlu0 0
      %496 = vperm.xlu0 %495, %v473
      %v497 = vpop.permute.xlu0 %496
      %498 = vset.pattern.permute.xlu0 0
      %499 = vperm.xlu0 %498, %v474
      %v500 = vpop.permute.xlu0 %499
      %501 = vset.pattern.permute.xlu0 0
      %502 = vperm.xlu0 %501, %v475
      %v503 = vpop.permute.xlu0 %502
      %504 = vset.pattern.permute.xlu0 0
      %505 = vperm.xlu0 %504, %v476
      %v506 = vpop.permute.xlu0 %505
      %507 = vset.pattern.permute.xlu0 0
      %508 = vperm.xlu0 %507, %v477
      %v509 = vpop.permute.xlu0 %508
      %510 = vset.pattern.permute.xlu0 0
      %511 = vperm.xlu0 %510, %v478
      %v512 = vpop.permute.xlu0 %511
      %513 = vset.pattern.permute.xlu0 0
      %514 = vperm.xlu0 %513, %v479
      %v515 = vpop.permute.xlu0 %514
      %516 = vset.pattern.permute.xlu0 0
      %517 = vperm.xlu0 %516, %v480
      %v518 = vpop.permute.xlu0 %517
      %519 = vset.pattern.permute.xlu0 0
      %520 = vperm.xlu0 %519, %v481
      %v521 = vpop.permute.xlu0 %520
      %522 = vset.pattern.permute.xlu0 0
      %523 = vperm.xlu0 %522, %v482
      %v524 = vpop.permute.xlu0 %523
      %525 = vset.pattern.permute.xlu0 0
      %526 = vperm.xlu0 %525, %v483
      %v527 = vpop.permute.xlu0 %526
      %528 = vset.pattern.permute.xlu0 0
      %529 = vperm.xlu0 %528, %v484
      %v530 = vpop.permute.xlu0 %529
      %531 = vset.pattern.permute.xlu0 0
      %532 = vperm.xlu0 %531, %v485
      %v533 = vpop.permute.xlu0 %532
      %v534 = vlaneseq
      %v535 = vshrl.u32 %v534, 7
      %v536 = vsub.s32 0, %v535
      %v537 = vrot.slane %v469, %v536
      %vm538 = vcmp.eq.s32.totalorder %v488, %v537
      %vm539 = vcmp.eq.s32.totalorder %v491, %v537
      %vm540 = vcmp.eq.s32.totalorder %v494, %v537
      %vm541 = vcmp.eq.s32.totalorder %v497, %v537
      %vm542 = vcmp.eq.s32.totalorder %v500, %v537
      %vm543 = vcmp.eq.s32.totalorder %v503, %v537
      %vm544 = vcmp.eq.s32.totalorder %v506, %v537
      %vm545 = vcmp.eq.s32.totalorder %v509, %v537
      %vm546 = vcmp.eq.s32.totalorder %v512, %v537
      %vm547 = vcmp.eq.s32.totalorder %v515, %v537
      %vm548 = vcmp.eq.s32.totalorder %v518, %v537
      %vm549 = vcmp.eq.s32.totalorder %v521, %v537
      %vm550 = vcmp.eq.s32.totalorder %v524, %v537
      %vm551 = vcmp.eq.s32.totalorder %v527, %v537
      %vm552 = vcmp.eq.s32.totalorder %v530, %v537
      %vm553 = vcmp.eq.s32.totalorder %v533, %v537
      %v554 = vsel %vm538, %v453, 0.0
      %v555 = vsel %vm539, %v454, 0.0
      %v556 = vsel %vm540, %v455, 0.0
      %v557 = vsel %vm541, %v456, 0.0
      %v558 = vsel %vm542, %v457, 0.0
      %v559 = vsel %vm543, %v458, 0.0
      %v560 = vsel %vm544, %v459, 0.0
      %v561 = vsel %vm545, %v460, 0.0
      %v562 = vsel %vm546, %v461, 0.0
      %v563 = vsel %vm547, %v462, 0.0
      %v564 = vsel %vm548, %v463, 0.0
      %v565 = vsel %vm549, %v464, 0.0
      %v566 = vsel %vm550, %v465, 0.0
      %v567 = vsel %vm551, %v466, 0.0
      %v568 = vsel %vm552, %v467, 0.0
      %v569 = vsel %vm553, %v468, 0.0
      %570 = vmax.xlane.f32.xlu0 %v554
      %v571 = vpop.xlane.xlu0 %570
      %572 = vmax.xlane.f32.xlu0 %v555
      %v573 = vpop.xlane.xlu0 %572
      %574 = vmax.xlane.f32.xlu0 %v556
      %v575 = vpop.xlane.xlu0 %574
      %576 = vmax.xlane.f32.xlu0 %v557
      %v577 = vpop.xlane.xlu0 %576
      %578 = vmax.xlane.f32.xlu0 %v558
      %v579 = vpop.xlane.xlu0 %578
      %580 = vmax.xlane.f32.xlu0 %v559
      %v581 = vpop.xlane.xlu0 %580
      %582 = vmax.xlane.f32.xlu0 %v560
      %v583 = vpop.xlane.xlu0 %582
      %584 = vmax.xlane.f32.xlu0 %v561
      %v585 = vpop.xlane.xlu0 %584
      %586 = vmax.xlane.f32.xlu0 %v562
      %v587 = vpop.xlane.xlu0 %586
      %588 = vmax.xlane.f32.xlu0 %v563
      %v589 = vpop.xlane.xlu0 %588
      %590 = vmax.xlane.f32.xlu0 %v564
      %v591 = vpop.xlane.xlu0 %590
      %592 = vmax.xlane.f32.xlu0 %v565
      %v593 = vpop.xlane.xlu0 %592
      %594 = vmax.xlane.f32.xlu0 %v566
      %v595 = vpop.xlane.xlu0 %594
      %596 = vmax.xlane.f32.xlu0 %v567
      %v597 = vpop.xlane.xlu0 %596
      %598 = vmax.xlane.f32.xlu0 %v568
      %v599 = vpop.xlane.xlu0 %598
      %600 = vmax.xlane.f32.xlu0 %v569
      %v601 = vpop.xlane.xlu0 %600
      %v602 = vrsqrt.pop %v571
      %v603 = vmul.f32 %v571, %v602
      %vm604 = vcmp.eq.f32.partialorder %v571, inf
      %v605 = vsel %vm604, %v571, %v603
      %vm606 = vcmp.eq.f32.partialorder %v571, 0.0
      %v607 = vand.u32 %v571, 2147483648
      %v608 = vsel %vm606, %v607, %v605
      %v609 = vrsqrt.pop %v573
      %v610 = vmul.f32 %v573, %v609
      %vm611 = vcmp.eq.f32.partialorder %v573, inf
      %v612 = vsel %vm611, %v573, %v610
      %vm613 = vcmp.eq.f32.partialorder %v573, 0.0
      %v614 = vand.u32 %v573, 2147483648
      %v615 = vsel %vm613, %v614, %v612
      %v616 = vrsqrt.pop %v575
      %v617 = vmul.f32 %v575, %v616
      %vm618 = vcmp.eq.f32.partialorder %v575, inf
      %v619 = vsel %vm618, %v575, %v617
      %vm620 = vcmp.eq.f32.partialorder %v575, 0.0
      %v621 = vand.u32 %v575, 2147483648
      %v622 = vsel %vm620, %v621, %v619
      %v623 = vrsqrt.pop %v577
      %v624 = vmul.f32 %v577, %v623
      %vm625 = vcmp.eq.f32.partialorder %v577, inf
      %v626 = vsel %vm625, %v577, %v624
      %vm627 = vcmp.eq.f32.partialorder %v577, 0.0
      %v628 = vand.u32 %v577, 2147483648
      %v629 = vsel %vm627, %v628, %v626
      %v630 = vrsqrt.pop %v579
      %v631 = vmul.f32 %v579, %v630
      %vm632 = vcmp.eq.f32.partialorder %v579, inf
      %v633 = vsel %vm632, %v579, %v631
      %vm634 = vcmp.eq.f32.partialorder %v579, 0.0
      %v635 = vand.u32 %v579, 2147483648
      %v636 = vsel %vm634, %v635, %v633
      %v637 = vrsqrt.pop %v581
      %v638 = vmul.f32 %v581, %v637
      %vm639 = vcmp.eq.f32.partialorder %v581, inf
      %v640 = vsel %vm639, %v581, %v638
      %vm641 = vcmp.eq.f32.partialorder %v581, 0.0
      %v642 = vand.u32 %v581, 2147483648
      %v643 = vsel %vm641, %v642, %v640
      %v644 = vrsqrt.pop %v583
      %v645 = vmul.f32 %v583, %v644
      %vm646 = vcmp.eq.f32.partialorder %v583, inf
      %v647 = vsel %vm646, %v583, %v645
      %vm648 = vcmp.eq.f32.partialorder %v583, 0.0
      %v649 = vand.u32 %v583, 2147483648
      %v650 = vsel %vm648, %v649, %v647
      %v651 = vrsqrt.pop %v585
      %v652 = vmul.f32 %v585, %v651
      %vm653 = vcmp.eq.f32.partialorder %v585, inf
      %v654 = vsel %vm653, %v585, %v652
      %vm655 = vcmp.eq.f32.partialorder %v585, 0.0
      %v656 = vand.u32 %v585, 2147483648
      %v657 = vsel %vm655, %v656, %v654
      %v658 = vrsqrt.pop %v587
      %v659 = vmul.f32 %v587, %v658
      %vm660 = vcmp.eq.f32.partialorder %v587, inf
      %v661 = vsel %vm660, %v587, %v659
      %vm662 = vcmp.eq.f32.partialorder %v587, 0.0
      %v663 = vand.u32 %v587, 2147483648
      %v664 = vsel %vm662, %v663, %v661
      %v665 = vrsqrt.pop %v589
      %v666 = vmul.f32 %v589, %v665
      %vm667 = vcmp.eq.f32.partialorder %v589, inf
      %v668 = vsel %vm667, %v589, %v666
      %vm669 = vcmp.eq.f32.partialorder %v589, 0.0
      %v670 = vand.u32 %v589, 2147483648
      %v671 = vsel %vm669, %v670, %v668
      %v672 = vrsqrt.pop %v591
      %v673 = vmul.f32 %v591, %v672
      %vm674 = vcmp.eq.f32.partialorder %v591, inf
      %v675 = vsel %vm674, %v591, %v673
      %vm676 = vcmp.eq.f32.partialorder %v591, 0.0
      %v677 = vand.u32 %v591, 2147483648
      %v678 = vsel %vm676, %v677, %v675
      %v679 = vrsqrt.pop %v593
      %v680 = vmul.f32 %v593, %v679
      %vm681 = vcmp.eq.f32.partialorder %v593, inf
      %v682 = vsel %vm681, %v593, %v680
      %vm683 = vcmp.eq.f32.partialorder %v593, 0.0
      %v684 = vand.u32 %v593, 2147483648
      %v685 = vsel %vm683, %v684, %v682
      %v686 = vrsqrt.pop %v595
      %v687 = vmul.f32 %v595, %v686
      %vm688 = vcmp.eq.f32.partialorder %v595, inf
      %v689 = vsel %vm688, %v595, %v687
      %vm690 = vcmp.eq.f32.partialorder %v595, 0.0
      %v691 = vand.u32 %v595, 2147483648
      %v692 = vsel %vm690, %v691, %v689
      %v693 = vrsqrt.pop %v597
      %v694 = vmul.f32 %v597, %v693
      %vm695 = vcmp.eq.f32.partialorder %v597, inf
      %v696 = vsel %vm695, %v597, %v694
      %vm697 = vcmp.eq.f32.partialorder %v597, 0.0
      %v698 = vand.u32 %v597, 2147483648
      %v699 = vsel %vm697, %v698, %v696
      %v700 = vrsqrt.pop %v599
      %v701 = vmul.f32 %v599, %v700
      %vm702 = vcmp.eq.f32.partialorder %v599, inf
      %v703 = vsel %vm702, %v599, %v701
      %vm704 = vcmp.eq.f32.partialorder %v599, 0.0
      %v705 = vand.u32 %v599, 2147483648
      %v706 = vsel %vm704, %v705, %v703
      %v707 = vrsqrt.pop %v601
      %v708 = vmul.f32 %v601, %v707
      %vm709 = vcmp.eq.f32.partialorder %v601, inf
      %v710 = vsel %vm709, %v601, %v708
      %vm711 = vcmp.eq.f32.partialorder %v601, 0.0
      %v712 = vand.u32 %v601, 2147483648
      %v713 = vsel %vm711, %v712, %v710
      %v714 = vsel %vm538, %v319, 128
      %v715 = vsel %vm539, %v319, 128
      %v716 = vsel %vm540, %v319, 128
      %v717 = vsel %vm541, %v319, 128
      %v718 = vsel %vm542, %v319, 128
      %v719 = vsel %vm543, %v319, 128
      %v720 = vsel %vm544, %v319, 128
      %v721 = vsel %vm545, %v319, 128
      %v722 = vsel %vm546, %v319, 128
      %v723 = vsel %vm547, %v319, 128
      %v724 = vsel %vm548, %v319, 128
      %v725 = vsel %vm549, %v319, 128
      %v726 = vsel %vm550, %v319, 128
      %v727 = vsel %vm551, %v319, 128
      %v728 = vsel %vm552, %v319, 128
      %v729 = vsel %vm553, %v319, 128
      %v730 = vand.u32 %v714, 65535
      %v731 = vshra.s32 %v714, 16
      %v732 = vcvt.s32.f32 %v730
      %v733 = vcvt.s32.f32 %v731
      %734 = vmin.xlane.f32.xlu0 %v733
      %v735 = vpop.xlane.xlu0 %734
      %vm736 = vcmp.eq.f32.partialorder %v733, %v735
      %v737 = vsel %vm736, %v732, inf
      %738 = vmin.xlane.f32.xlu0 %v737
      %v739 = vpop.xlane.xlu0 %738
      %v740 = vcvt.f32.s32 %v739
      %v741 = vcvt.f32.s32 %v735
      %v742 = vshll.u32 %v741, 16
      %v743 = vadd.s32 %v742, %v740
      %v744 = vand.u32 %v715, 65535
      %v745 = vshra.s32 %v715, 16
      %v746 = vcvt.s32.f32 %v744
      %v747 = vcvt.s32.f32 %v745
      %748 = vmin.xlane.f32.xlu0 %v747
      %v749 = vpop.xlane.xlu0 %748
      %vm750 = vcmp.eq.f32.partialorder %v747, %v749
      %v751 = vsel %vm750, %v746, inf
      %752 = vmin.xlane.f32.xlu0 %v751
      %v753 = vpop.xlane.xlu0 %752
      %v754 = vcvt.f32.s32 %v753
      %v755 = vcvt.f32.s32 %v749
      %v756 = vshll.u32 %v755, 16
      %v757 = vadd.s32 %v756, %v754
      %v758 = vand.u32 %v716, 65535
      %v759 = vshra.s32 %v716, 16
      %v760 = vcvt.s32.f32 %v758
      %v761 = vcvt.s32.f32 %v759
      %762 = vmin.xlane.f32.xlu0 %v761
      %v763 = vpop.xlane.xlu0 %762
      %vm764 = vcmp.eq.f32.partialorder %v761, %v763
      %v765 = vsel %vm764, %v760, inf
      %766 = vmin.xlane.f32.xlu0 %v765
      %v767 = vpop.xlane.xlu0 %766
      %v768 = vcvt.f32.s32 %v767
      %v769 = vcvt.f32.s32 %v763
      %v770 = vshll.u32 %v769, 16
      %v771 = vadd.s32 %v770, %v768
      %v772 = vand.u32 %v717, 65535
      %v773 = vshra.s32 %v717, 16
      %v774 = vcvt.s32.f32 %v772
      %v775 = vcvt.s32.f32 %v773
      %776 = vmin.xlane.f32.xlu0 %v775
      %v777 = vpop.xlane.xlu0 %776
      %vm778 = vcmp.eq.f32.partialorder %v775, %v777
      %v779 = vsel %vm778, %v774, inf
      %780 = vmin.xlane.f32.xlu0 %v779
      %v781 = vpop.xlane.xlu0 %780
      %v782 = vcvt.f32.s32 %v781
      %v783 = vcvt.f32.s32 %v777
      %v784 = vshll.u32 %v783, 16
      %v785 = vadd.s32 %v784, %v782
      %v786 = vand.u32 %v718, 65535
      %v787 = vshra.s32 %v718, 16
      %v788 = vcvt.s32.f32 %v786
      %v789 = vcvt.s32.f32 %v787
      %790 = vmin.xlane.f32.xlu0 %v789
      %v791 = vpop.xlane.xlu0 %790
      %vm792 = vcmp.eq.f32.partialorder %v789, %v791
      %v793 = vsel %vm792, %v788, inf
      %794 = vmin.xlane.f32.xlu0 %v793
      %v795 = vpop.xlane.xlu0 %794
      %v796 = vcvt.f32.s32 %v795
      %v797 = vcvt.f32.s32 %v791
      %v798 = vshll.u32 %v797, 16
      %v799 = vadd.s32 %v798, %v796
      %v800 = vand.u32 %v719, 65535
      %v801 = vshra.s32 %v719, 16
      %v802 = vcvt.s32.f32 %v800
      %v803 = vcvt.s32.f32 %v801
      %804 = vmin.xlane.f32.xlu0 %v803
      %v805 = vpop.xlane.xlu0 %804
      %vm806 = vcmp.eq.f32.partialorder %v803, %v805
      %v807 = vsel %vm806, %v802, inf
      %808 = vmin.xlane.f32.xlu0 %v807
      %v809 = vpop.xlane.xlu0 %808
      %v810 = vcvt.f32.s32 %v809
      %v811 = vcvt.f32.s32 %v805
      %v812 = vshll.u32 %v811, 16
      %v813 = vadd.s32 %v812, %v810
      %v814 = vand.u32 %v720, 65535
      %v815 = vshra.s32 %v720, 16
      %v816 = vcvt.s32.f32 %v814
      %v817 = vcvt.s32.f32 %v815
      %818 = vmin.xlane.f32.xlu0 %v817
      %v819 = vpop.xlane.xlu0 %818
      %vm820 = vcmp.eq.f32.partialorder %v817, %v819
      %v821 = vsel %vm820, %v816, inf
      %822 = vmin.xlane.f32.xlu0 %v821
      %v823 = vpop.xlane.xlu0 %822
      %v824 = vcvt.f32.s32 %v823
      %v825 = vcvt.f32.s32 %v819
      %v826 = vshll.u32 %v825, 16
      %v827 = vadd.s32 %v826, %v824
      %v828 = vand.u32 %v721, 65535
      %v829 = vshra.s32 %v721, 16
      %v830 = vcvt.s32.f32 %v828
      %v831 = vcvt.s32.f32 %v829
      %832 = vmin.xlane.f32.xlu0 %v831
      %v833 = vpop.xlane.xlu0 %832
      %vm834 = vcmp.eq.f32.partialorder %v831, %v833
      %v835 = vsel %vm834, %v830, inf
      %836 = vmin.xlane.f32.xlu0 %v835
      %v837 = vpop.xlane.xlu0 %836
      %v838 = vcvt.f32.s32 %v837
      %v839 = vcvt.f32.s32 %v833
      %v840 = vshll.u32 %v839, 16
      %v841 = vadd.s32 %v840, %v838
      %v842 = vand.u32 %v722, 65535
      %v843 = vshra.s32 %v722, 16
      %v844 = vcvt.s32.f32 %v842
      %v845 = vcvt.s32.f32 %v843
      %846 = vmin.xlane.f32.xlu0 %v845
      %v847 = vpop.xlane.xlu0 %846
      %vm848 = vcmp.eq.f32.partialorder %v845, %v847
      %v849 = vsel %vm848, %v844, inf
      %850 = vmin.xlane.f32.xlu0 %v849
      %v851 = vpop.xlane.xlu0 %850
      %v852 = vcvt.f32.s32 %v851
      %v853 = vcvt.f32.s32 %v847
      %v854 = vshll.u32 %v853, 16
      %v855 = vadd.s32 %v854, %v852
      %v856 = vand.u32 %v723, 65535
      %v857 = vshra.s32 %v723, 16
      %v858 = vcvt.s32.f32 %v856
      %v859 = vcvt.s32.f32 %v857
      %860 = vmin.xlane.f32.xlu0 %v859
      %v861 = vpop.xlane.xlu0 %860
      %vm862 = vcmp.eq.f32.partialorder %v859, %v861
      %v863 = vsel %vm862, %v858, inf
      %864 = vmin.xlane.f32.xlu0 %v863
      %v865 = vpop.xlane.xlu0 %864
      %v866 = vcvt.f32.s32 %v865
      %v867 = vcvt.f32.s32 %v861
      %v868 = vshll.u32 %v867, 16
      %v869 = vadd.s32 %v868, %v866
      %v870 = vand.u32 %v724, 65535
      %v871 = vshra.s32 %v724, 16
      %v872 = vcvt.s32.f32 %v870
      %v873 = vcvt.s32.f32 %v871
      %874 = vmin.xlane.f32.xlu0 %v873
      %v875 = vpop.xlane.xlu0 %874
      %vm876 = vcmp.eq.f32.partialorder %v873, %v875
      %v877 = vsel %vm876, %v872, inf
      %878 = vmin.xlane.f32.xlu0 %v877
      %v879 = vpop.xlane.xlu0 %878
      %v880 = vcvt.f32.s32 %v879
      %v881 = vcvt.f32.s32 %v875
      %v882 = vshll.u32 %v881, 16
      %v883 = vadd.s32 %v882, %v880
      %v884 = vand.u32 %v725, 65535
      %v885 = vshra.s32 %v725, 16
      %v886 = vcvt.s32.f32 %v884
      %v887 = vcvt.s32.f32 %v885
      %888 = vmin.xlane.f32.xlu0 %v887
      %v889 = vpop.xlane.xlu0 %888
      %vm890 = vcmp.eq.f32.partialorder %v887, %v889
      %v891 = vsel %vm890, %v886, inf
      %892 = vmin.xlane.f32.xlu0 %v891
      %v893 = vpop.xlane.xlu0 %892
      %v894 = vcvt.f32.s32 %v893
      %v895 = vcvt.f32.s32 %v889
      %v896 = vshll.u32 %v895, 16
      %v897 = vadd.s32 %v896, %v894
      %v898 = vand.u32 %v726, 65535
      %v899 = vshra.s32 %v726, 16
      %v900 = vcvt.s32.f32 %v898
      %v901 = vcvt.s32.f32 %v899
      %902 = vmin.xlane.f32.xlu0 %v901
      %v903 = vpop.xlane.xlu0 %902
      %vm904 = vcmp.eq.f32.partialorder %v901, %v903
      %v905 = vsel %vm904, %v900, inf
      %906 = vmin.xlane.f32.xlu0 %v905
      %v907 = vpop.xlane.xlu0 %906
      %v908 = vcvt.f32.s32 %v907
      %v909 = vcvt.f32.s32 %v903
      %v910 = vshll.u32 %v909, 16
      %v911 = vadd.s32 %v910, %v908
      %v912 = vand.u32 %v727, 65535
      %v913 = vshra.s32 %v727, 16
      %v914 = vcvt.s32.f32 %v912
      %v915 = vcvt.s32.f32 %v913
      %916 = vmin.xlane.f32.xlu0 %v915
      %v917 = vpop.xlane.xlu0 %916
      %vm918 = vcmp.eq.f32.partialorder %v915, %v917
      %v919 = vsel %vm918, %v914, inf
      %920 = vmin.xlane.f32.xlu0 %v919
      %v921 = vpop.xlane.xlu0 %920
      %v922 = vcvt.f32.s32 %v921
      %v923 = vcvt.f32.s32 %v917
      %v924 = vshll.u32 %v923, 16
      %v925 = vadd.s32 %v924, %v922
      %v926 = vand.u32 %v728, 65535
      %v927 = vshra.s32 %v728, 16
      %v928 = vcvt.s32.f32 %v926
      %v929 = vcvt.s32.f32 %v927
      %930 = vmin.xlane.f32.xlu0 %v929
      %v931 = vpop.xlane.xlu0 %930
      %vm932 = vcmp.eq.f32.partialorder %v929, %v931
      %v933 = vsel %vm932, %v928, inf
      %934 = vmin.xlane.f32.xlu0 %v933
      %v935 = vpop.xlane.xlu0 %934
      %v936 = vcvt.f32.s32 %v935
      %v937 = vcvt.f32.s32 %v931
      %v938 = vshll.u32 %v937, 16
      %v939 = vadd.s32 %v938, %v936
      %v940 = vand.u32 %v729, 65535
      %v941 = vshra.s32 %v729, 16
      %v942 = vcvt.s32.f32 %v940
      %v943 = vcvt.s32.f32 %v941
      %944 = vmin.xlane.f32.xlu0 %v943
      %v945 = vpop.xlane.xlu0 %944
      %vm946 = vcmp.eq.f32.partialorder %v943, %v945
      %v947 = vsel %vm946, %v942, inf
      %948 = vmin.xlane.f32.xlu0 %v947
      %v949 = vpop.xlane.xlu0 %948
      %v950 = vcvt.f32.s32 %v949
      %v951 = vcvt.f32.s32 %v945
      %v952 = vshll.u32 %v951, 16
      %v953 = vadd.s32 %v952, %v950
      %vm954 = vcmp.eq.s32.totalorder %v319, %v743
      %vm955 = vcmp.eq.s32.totalorder %v319, %v757
      %vm956 = vcmp.eq.s32.totalorder %v319, %v771
      %vm957 = vcmp.eq.s32.totalorder %v319, %v785
      %vm958 = vcmp.eq.s32.totalorder %v319, %v799
      %vm959 = vcmp.eq.s32.totalorder %v319, %v813
      %vm960 = vcmp.eq.s32.totalorder %v319, %v827
      %vm961 = vcmp.eq.s32.totalorder %v319, %v841
      %vm962 = vcmp.eq.s32.totalorder %v319, %v855
      %vm963 = vcmp.eq.s32.totalorder %v319, %v869
      %vm964 = vcmp.eq.s32.totalorder %v319, %v883
      %vm965 = vcmp.eq.s32.totalorder %v319, %v897
      %vm966 = vcmp.eq.s32.totalorder %v319, %v911
      %vm967 = vcmp.eq.s32.totalorder %v319, %v925
      %vm968 = vcmp.eq.s32.totalorder %v319, %v939
      %vm969 = vcmp.eq.s32.totalorder %v319, %v953
      %v970 = vsel %vm954, %v437, 0.0
      %v971 = vsel %vm955, %v438, 0.0
      %v972 = vsel %vm956, %v439, 0.0
      %v973 = vsel %vm957, %v440, 0.0
      %v974 = vsel %vm958, %v441, 0.0
      %v975 = vsel %vm959, %v442, 0.0
      %v976 = vsel %vm960, %v443, 0.0
      %v977 = vsel %vm961, %v444, 0.0
      %v978 = vsel %vm962, %v445, 0.0
      %v979 = vsel %vm963, %v446, 0.0
      %v980 = vsel %vm964, %v447, 0.0
      %v981 = vsel %vm965, %v448, 0.0
      %v982 = vsel %vm966, %v449, 0.0
      %v983 = vsel %vm967, %v450, 0.0
      %v984 = vsel %vm968, %v451, 0.0
      %v985 = vsel %vm969, %v452, 0.0
      %986 = vadd.xlane.f32.xlu0 %v970
      %v987 = vpop.xlane.xlu0 %986
      %988 = vadd.xlane.f32.xlu0 %v971
      %v989 = vpop.xlane.xlu0 %988
      %990 = vadd.xlane.f32.xlu0 %v972
      %v991 = vpop.xlane.xlu0 %990
      %992 = vadd.xlane.f32.xlu0 %v973
      %v993 = vpop.xlane.xlu0 %992
      %994 = vadd.xlane.f32.xlu0 %v974
      %v995 = vpop.xlane.xlu0 %994
      %996 = vadd.xlane.f32.xlu0 %v975
      %v997 = vpop.xlane.xlu0 %996
      %998 = vadd.xlane.f32.xlu0 %v976
      %v999 = vpop.xlane.xlu0 %998
      %1000 = vadd.xlane.f32.xlu0 %v977
      %v1001 = vpop.xlane.xlu0 %1000
      %1002 = vadd.xlane.f32.xlu0 %v978
      %v1003 = vpop.xlane.xlu0 %1002
      %1004 = vadd.xlane.f32.xlu0 %v979
      %v1005 = vpop.xlane.xlu0 %1004
      %1006 = vadd.xlane.f32.xlu0 %v980
      %v1007 = vpop.xlane.xlu0 %1006
      %1008 = vadd.xlane.f32.xlu0 %v981
      %v1009 = vpop.xlane.xlu0 %1008
      %1010 = vadd.xlane.f32.xlu0 %v982
      %v1011 = vpop.xlane.xlu0 %1010
      %1012 = vadd.xlane.f32.xlu0 %v983
      %v1013 = vpop.xlane.xlu0 %1012
      %1014 = vadd.xlane.f32.xlu0 %v984
      %v1015 = vpop.xlane.xlu0 %1014
      %1016 = vadd.xlane.f32.xlu0 %v985
      %v1017 = vpop.xlane.xlu0 %1016
      %v1018 = vmax.f32 %v987, 0.0
      %v1019 = vmax.f32 %v989, 0.0
      %v1020 = vmax.f32 %v991, 0.0
      %v1021 = vmax.f32 %v993, 0.0
      %v1022 = vmax.f32 %v995, 0.0
      %v1023 = vmax.f32 %v997, 0.0
      %v1024 = vmax.f32 %v999, 0.0
      %v1025 = vmax.f32 %v1001, 0.0
      %v1026 = vmax.f32 %v1003, 0.0
      %v1027 = vmax.f32 %v1005, 0.0
      %v1028 = vmax.f32 %v1007, 0.0
      %v1029 = vmax.f32 %v1009, 0.0
      %v1030 = vmax.f32 %v1011, 0.0
      %v1031 = vmax.f32 %v1013, 0.0
      %v1032 = vmax.f32 %v1015, 0.0
      %v1033 = vmax.f32 %v1017, 0.0
      %v1034 = vrsqrt.pop %v1018
      %v1035 = vmul.f32 %v1018, %v1034
      %vm1036 = vcmp.eq.f32.partialorder %v1018, inf
      %v1037 = vsel %vm1036, %v1018, %v1035
      %vm1038 = vcmp.eq.f32.partialorder %v1018, 0.0
      %v1039 = vand.u32 %v1018, 2147483648
      %v1040 = vsel %vm1038, %v1039, %v1037
      %v1041 = vrsqrt.pop %v1019
      %v1042 = vmul.f32 %v1019, %v1041
      %vm1043 = vcmp.eq.f32.partialorder %v1019, inf
      %v1044 = vsel %vm1043, %v1019, %v1042
      %vm1045 = vcmp.eq.f32.partialorder %v1019, 0.0
      %v1046 = vand.u32 %v1019, 2147483648
      %v1047 = vsel %vm1045, %v1046, %v1044
      %v1048 = vrsqrt.pop %v1020
      %v1049 = vmul.f32 %v1020, %v1048
      %vm1050 = vcmp.eq.f32.partialorder %v1020, inf
      %v1051 = vsel %vm1050, %v1020, %v1049
      %vm1052 = vcmp.eq.f32.partialorder %v1020, 0.0
      %v1053 = vand.u32 %v1020, 2147483648
      %v1054 = vsel %vm1052, %v1053, %v1051
      %v1055 = vrsqrt.pop %v1021
      %v1056 = vmul.f32 %v1021, %v1055
      %vm1057 = vcmp.eq.f32.partialorder %v1021, inf
      %v1058 = vsel %vm1057, %v1021, %v1056
      %vm1059 = vcmp.eq.f32.partialorder %v1021, 0.0
      %v1060 = vand.u32 %v1021, 2147483648
      %v1061 = vsel %vm1059, %v1060, %v1058
      %v1062 = vrsqrt.pop %v1022
      %v1063 = vmul.f32 %v1022, %v1062
      %vm1064 = vcmp.eq.f32.partialorder %v1022, inf
      %v1065 = vsel %vm1064, %v1022, %v1063
      %vm1066 = vcmp.eq.f32.partialorder %v1022, 0.0
      %v1067 = vand.u32 %v1022, 2147483648
      %v1068 = vsel %vm1066, %v1067, %v1065
      %v1069 = vrsqrt.pop %v1023
      %v1070 = vmul.f32 %v1023, %v1069
      %vm1071 = vcmp.eq.f32.partialorder %v1023, inf
      %v1072 = vsel %vm1071, %v1023, %v1070
      %vm1073 = vcmp.eq.f32.partialorder %v1023, 0.0
      %v1074 = vand.u32 %v1023, 2147483648
      %v1075 = vsel %vm1073, %v1074, %v1072
      %v1076 = vrsqrt.pop %v1024
      %v1077 = vmul.f32 %v1024, %v1076
      %vm1078 = vcmp.eq.f32.partialorder %v1024, inf
      %v1079 = vsel %vm1078, %v1024, %v1077
      %vm1080 = vcmp.eq.f32.partialorder %v1024, 0.0
      %v1081 = vand.u32 %v1024, 2147483648
      %v1082 = vsel %vm1080, %v1081, %v1079
      %v1083 = vrsqrt.pop %v1025
      %v1084 = vmul.f32 %v1025, %v1083
      %vm1085 = vcmp.eq.f32.partialorder %v1025, inf
      %v1086 = vsel %vm1085, %v1025, %v1084
      %vm1087 = vcmp.eq.f32.partialorder %v1025, 0.0
      %v1088 = vand.u32 %v1025, 2147483648
      %v1089 = vsel %vm1087, %v1088, %v1086
      %v1090 = vrsqrt.pop %v1026
      %v1091 = vmul.f32 %v1026, %v1090
      %vm1092 = vcmp.eq.f32.partialorder %v1026, inf
      %v1093 = vsel %vm1092, %v1026, %v1091
      %vm1094 = vcmp.eq.f32.partialorder %v1026, 0.0
      %v1095 = vand.u32 %v1026, 2147483648
      %v1096 = vsel %vm1094, %v1095, %v1093
      %v1097 = vrsqrt.pop %v1027
      %v1098 = vmul.f32 %v1027, %v1097
      %vm1099 = vcmp.eq.f32.partialorder %v1027, inf
      %v1100 = vsel %vm1099, %v1027, %v1098
      %vm1101 = vcmp.eq.f32.partialorder %v1027, 0.0
      %v1102 = vand.u32 %v1027, 2147483648
      %v1103 = vsel %vm1101, %v1102, %v1100
      %v1104 = vrsqrt.pop %v1028
      %v1105 = vmul.f32 %v1028, %v1104
      %vm1106 = vcmp.eq.f32.partialorder %v1028, inf
      %v1107 = vsel %vm1106, %v1028, %v1105
      %vm1108 = vcmp.eq.f32.partialorder %v1028, 0.0
      %v1109 = vand.u32 %v1028, 2147483648
      %v1110 = vsel %vm1108, %v1109, %v1107
      %v1111 = vrsqrt.pop %v1029
      %v1112 = vmul.f32 %v1029, %v1111
      %vm1113 = vcmp.eq.f32.partialorder %v1029, inf
      %v1114 = vsel %vm1113, %v1029, %v1112
      %vm1115 = vcmp.eq.f32.partialorder %v1029, 0.0
      %v1116 = vand.u32 %v1029, 2147483648
      %v1117 = vsel %vm1115, %v1116, %v1114
      %v1118 = vrsqrt.pop %v1030
      %v1119 = vmul.f32 %v1030, %v1118
      %vm1120 = vcmp.eq.f32.partialorder %v1030, inf
      %v1121 = vsel %vm1120, %v1030, %v1119
      %vm1122 = vcmp.eq.f32.partialorder %v1030, 0.0
      %v1123 = vand.u32 %v1030, 2147483648
      %v1124 = vsel %vm1122, %v1123, %v1121
      %v1125 = vrsqrt.pop %v1031
      %v1126 = vmul.f32 %v1031, %v1125
      %vm1127 = vcmp.eq.f32.partialorder %v1031, inf
      %v1128 = vsel %vm1127, %v1031, %v1126
      %vm1129 = vcmp.eq.f32.partialorder %v1031, 0.0
      %v1130 = vand.u32 %v1031, 2147483648
      %v1131 = vsel %vm1129, %v1130, %v1128
      %v1132 = vrsqrt.pop %v1032
      %v1133 = vmul.f32 %v1032, %v1132
      %vm1134 = vcmp.eq.f32.partialorder %v1032, inf
      %v1135 = vsel %vm1134, %v1032, %v1133
      %vm1136 = vcmp.eq.f32.partialorder %v1032, 0.0
      %v1137 = vand.u32 %v1032, 2147483648
      %v1138 = vsel %vm1136, %v1137, %v1135
      %v1139 = vrsqrt.pop %v1033
      %v1140 = vmul.f32 %v1033, %v1139
      %vm1141 = vcmp.eq.f32.partialorder %v1033, inf
      %v1142 = vsel %vm1141, %v1033, %v1140
      %vm1143 = vcmp.eq.f32.partialorder %v1033, 0.0
      %v1144 = vand.u32 %v1033, 2147483648
      %v1145 = vsel %vm1143, %v1144, %v1142
      %s1146 = sld [smem:[#allocation3]]
      %v1147 = vsub.f32 %v608, %v1040
      %v1148 = vsub.f32 %v615, %v1047
      %v1149 = vsub.f32 %v622, %v1054
      %v1150 = vsub.f32 %v629, %v1061
      %v1151 = vsub.f32 %v636, %v1068
      %v1152 = vsub.f32 %v643, %v1075
      %v1153 = vsub.f32 %v650, %v1082
      %v1154 = vsub.f32 %v657, %v1089
      %v1155 = vsub.f32 %v664, %v1096
      %v1156 = vsub.f32 %v671, %v1103
      %v1157 = vsub.f32 %v678, %v1110
      %v1158 = vsub.f32 %v685, %v1117
      %v1159 = vsub.f32 %v692, %v1124
      %v1160 = vsub.f32 %v699, %v1131
      %v1161 = vsub.f32 %v706, %v1138
      %v1162 = vsub.f32 %v713, %v1145
      %v1163 = vstv %s1146
      %v1164 = vadd.f32 %v1147, %v1163
      %v1165 = vadd.f32 %v1148, %v1163
      %v1166 = vadd.f32 %v1149, %v1163
      %v1167 = vadd.f32 %v1150, %v1163
      %v1168 = vadd.f32 %v1151, %v1163
      %v1169 = vadd.f32 %v1152, %v1163
      %v1170 = vadd.f32 %v1153, %v1163
      %v1171 = vadd.f32 %v1154, %v1163
      %v1172 = vadd.f32 %v1155, %v1163
      %v1173 = vadd.f32 %v1156, %v1163
      %v1174 = vadd.f32 %v1157, %v1163
      %v1175 = vadd.f32 %v1158, %v1163
      %v1176 = vadd.f32 %v1159, %v1163
      %v1177 = vadd.f32 %v1160, %v1163
      %v1178 = vadd.f32 %v1161, %v1163
      %v1179 = vadd.f32 %v1162, %v1163
      %v1180 = vmax.f32 %v1164, 0.0
      %v1181 = vmax.f32 %v1165, 0.0
      %v1182 = vmax.f32 %v1166, 0.0
      %v1183 = vmax.f32 %v1167, 0.0
      %v1184 = vmax.f32 %v1168, 0.0
      %v1185 = vmax.f32 %v1169, 0.0
      %v1186 = vmax.f32 %v1170, 0.0
      %v1187 = vmax.f32 %v1171, 0.0
      %v1188 = vmax.f32 %v1172, 0.0
      %v1189 = vmax.f32 %v1173, 0.0
      %v1190 = vmax.f32 %v1174, 0.0
      %v1191 = vmax.f32 %v1175, 0.0
      %v1192 = vmax.f32 %v1176, 0.0
      %v1193 = vmax.f32 %v1177, 0.0
      %v1194 = vmax.f32 %v1178, 0.0
      %v1195 = vmax.f32 %v1179, 0.0
      %s1196 = sld [smem:[#allocation4]]
      %v1197 = vstv %s1196
      %vm1198 = vcmp.lt.s32.totalorder %v302, %v1197
      %vm1199 = vcmp.lt.s32.totalorder %v303, %v1197
      %vm1200 = vcmp.lt.s32.totalorder %v304, %v1197
      %vm1201 = vcmp.lt.s32.totalorder %v305, %v1197
      %vm1202 = vcmp.lt.s32.totalorder %v306, %v1197
      %vm1203 = vcmp.lt.s32.totalorder %v307, %v1197
      %vm1204 = vcmp.lt.s32.totalorder %v308, %v1197
      %vm1205 = vcmp.lt.s32.totalorder %v309, %v1197
      %vm1206 = vcmp.lt.s32.totalorder %v310, %v1197
      %vm1207 = vcmp.lt.s32.totalorder %v311, %v1197
      %vm1208 = vcmp.lt.s32.totalorder %v312, %v1197
      %vm1209 = vcmp.lt.s32.totalorder %v313, %v1197
      %vm1210 = vcmp.lt.s32.totalorder %v314, %v1197
      %vm1211 = vcmp.lt.s32.totalorder %v315, %v1197
      %vm1212 = vcmp.lt.s32.totalorder %v316, %v1197
      %vm1213 = vcmp.lt.s32.totalorder %v317, %v1197
      %v1214 = vsel %vm1198, 1, 0
      %v1215 = vsel %vm1199, 1, 0
      %v1216 = vsel %vm1200, 1, 0
      %v1217 = vsel %vm1201, 1, 0
      %v1218 = vsel %vm1202, 1, 0
      %v1219 = vsel %vm1203, 1, 0
      %v1220 = vsel %vm1204, 1, 0
      %v1221 = vsel %vm1205, 1, 0
      %v1222 = vsel %vm1206, 1, 0
      %v1223 = vsel %vm1207, 1, 0
      %v1224 = vsel %vm1208, 1, 0
      %v1225 = vsel %vm1209, 1, 0
      %v1226 = vsel %vm1210, 1, 0
      %v1227 = vsel %vm1211, 1, 0
      %v1228 = vsel %vm1212, 1, 0
      %v1229 = vsel %vm1213, 1, 0
      %v1230 = vcvt.s32.f32 %v1214
      %v1231 = vcvt.s32.f32 %v1215
      %v1232 = vcvt.s32.f32 %v1216
      %v1233 = vcvt.s32.f32 %v1217
      %v1234 = vcvt.s32.f32 %v1218
      %v1235 = vcvt.s32.f32 %v1219
      %v1236 = vcvt.s32.f32 %v1220
      %v1237 = vcvt.s32.f32 %v1221
      %v1238 = vcvt.s32.f32 %v1222
      %v1239 = vcvt.s32.f32 %v1223
      %v1240 = vcvt.s32.f32 %v1224
      %v1241 = vcvt.s32.f32 %v1225
      %v1242 = vcvt.s32.f32 %v1226
      %v1243 = vcvt.s32.f32 %v1227
      %v1244 = vcvt.s32.f32 %v1228
      %v1245 = vcvt.s32.f32 %v1229
      %v1246 = vmul.f32 %v1180, %v1230
      %v1247 = vmul.f32 %v1181, %v1231
      %v1248 = vmul.f32 %v1182, %v1232
      %v1249 = vmul.f32 %v1183, %v1233
      %v1250 = vmul.f32 %v1184, %v1234
      %v1251 = vmul.f32 %v1185, %v1235
      %v1252 = vmul.f32 %v1186, %v1236
      %v1253 = vmul.f32 %v1187, %v1237
      %v1254 = vmul.f32 %v1188, %v1238
      %v1255 = vmul.f32 %v1189, %v1239
      %v1256 = vmul.f32 %v1190, %v1240
      %v1257 = vmul.f32 %v1191, %v1241
      %v1258 = vmul.f32 %v1192, %v1242
      %v1259 = vmul.f32 %v1193, %v1243
      %v1260 = vmul.f32 %v1194, %v1244
      %v1261 = vmul.f32 %v1195, %v1245
      %v1262 = vadd.f32 %v1246, %v1247
      %v1263 = vadd.f32 %v1262, %v1248
      %v1264 = vadd.f32 %v1263, %v1249
      %v1265 = vadd.f32 %v1264, %v1250
      %v1266 = vadd.f32 %v1265, %v1251
      %v1267 = vadd.f32 %v1266, %v1252
      %v1268 = vadd.f32 %v1267, %v1253
      %v1269 = vadd.f32 %v1268, %v1254
      %v1270 = vadd.f32 %v1269, %v1255
      %v1271 = vadd.f32 %v1270, %v1256
      %v1272 = vadd.f32 %v1271, %v1257
      %v1273 = vadd.f32 %v1272, %v1258
      %v1274 = vadd.f32 %v1273, %v1259
      %v1275 = vadd.f32 %v1274, %v1260
      %v1276 = vadd.f32 %v1275, %v1261
      %v1277 = vrot.slane %v1276, 4
      %v1278 = vadd.f32 %v1276, %v1277
      %v1279 = vrot.slane %v1278, 2
      %v1280 = vadd.f32 %v1278, %v1279
      %v1281 = vrot.slane %v1280, 1
      %v1282 = vadd.f32 %v1280, %v1281
      %s1283 = scvt.s32.f32 %s1196
      %v1284 = vstv %s1283
      %v1285 = vrcp.pop %v1284
      %v1286 = vmul.f32 %v1282, %v1285
      %vm1287 = vcmask 0
      %1288 = vst.msk [vmem:[#allocation8] sm:$0x1] %vm1287, %v1286
    $region33: #{tpu_custom_call.1} parent=1 // pred_fallthru
      _
    // Predicated region
    $region34: #{tpu_custom_call.1} parent=1 // pred_check
      _
    $region35: #{tpu_custom_call.1} parent=1 // pred_check_branch
      %1290 = sbr.rel (0) target = $region37
    $region36: #{tpu_custom_call.1} parent=1 // pred_region
      %s1292 = ssub.s32 16, 16
      %1293 = vsyncadd [#allocation7], %s1292
      %s1295 = sshll.u32 [#allocation8], 4
      %s1296 = int_to_ptr.vmem [resolvable:$true] %s1295
      %1298 = dma.vmem_to_hbm [thread:$0]  %s1296, 16, %s5, [#allocation7]
    $region37: #{tpu_custom_call.1} parent=1 // pred_fallthru
      _
    // Predicated region
    $region38: #{tpu_custom_call.1} parent=1 // pred_check
      _
    $region39: #{tpu_custom_call.1} parent=1 // pred_check_branch
      %1300 = sbr.rel (0) target = $region41
    $region40: #{tpu_custom_call.1} parent=1 // pred_region
      %1301 = dma.done [#allocation7], 16
    $region41: #{tpu_custom_call.1} parent=1 // pred_fallthru
      _
    %1302 = vsyncpa [#allocation6], 1
    %1303 = vsyncpa [#allocation7], 1

</llo_original>
